<compile_context>
chip_gen: v5e
topology: v5e:2x2
jax: 0.10.0
libtpu: 0.0.40
codegen_flags: <defaults>
</compile_context>

<pallas_src>
import functools

import jax
import jax.numpy as jnp
from jax import lax
from jax.experimental import pallas as pl
from jax.experimental.pallas import tpu as pltpu


def _round_up(x, m):
    return (x + m - 1) // m * m


def _ln_relu_write(y, p_ref, o_ref, *, eps, f_logical):
    """bias -> LayerNorm -> ReLU on an f32 (tm, Fp) tile, store to o_ref."""
    fp = o_ref.shape[-1]
    p = p_ref[...]                              # (3, Fp) f32
    bias, gamma, beta = p[0:1, :], p[1:2, :], p[2:3, :]

    y = y + bias                                # padded lanes stay exactly 0
    inv_f = jnp.float32(1.0 / f_logical)
    u = jnp.sum(y, axis=-1, keepdims=True) * inv_f     # padded lanes add 0
    d = y - u
    s = jnp.sum(d * d, axis=-1, keepdims=True)
    if fp != f_logical:
        # Padded lanes have d == -u exactly: remove their contribution with a
        # scalar correction instead of a whole-tile select.
        s = s - jnp.float32(fp - f_logical) * (u * u)
    s = s * inv_f
    y_norm = d * lax.rsqrt(s + jnp.float32(eps))        # rsqrt -> EUP slot
    # gamma/beta are zero-padded, so padded output lanes come out as 0.
    o_ref[...] = jnp.maximum(gamma * y_norm + beta, 0.0).astype(o_ref.dtype)


def _mlp_kernel_resident(x_ref, w_ref, p_ref, o_ref, *, eps, f_logical, precision):
    # x_ref: (tm, Hp), w_ref: (Hp, Fp) resident, p_ref: (3, Fp), o_ref: (tm, Fp)
    y = jnp.dot(x_ref[...], w_ref[...],
                preferred_element_type=jnp.float32, precision=precision)
    _ln_relu_write(y, p_ref, o_ref, eps=eps, f_logical=f_logical)


def _mlp_kernel_ktiled(x_ref, w_ref, p_ref, o_ref, acc_ref, *, eps, f_logical,
                       precision):
    # grid = (row tiles, K tiles); acc_ref: (tm, Fp) f32 scratch accumulator.
    k = pl.program_id(1)

    @pl.when(k == 0)
    def _():
        acc_ref[...] = jnp.zeros_like(acc_ref)

    acc_ref[...] += jnp.dot(x_ref[...], w_ref[...],
                            preferred_element_type=jnp.float32,
                            precision=precision)

    @pl.when(k == pl.num_programs(1) - 1)
    def _():
        _ln_relu_write(acc_ref[...], p_ref, o_ref, eps=eps, f_logical=f_logical)


def mlp_forward(x, w, b, gamma, beta, *, eps=1e-5, row_tile=512,
                matmul_dtype=None):
    """x: (..., H) -> (..., F).  w: (F, H) PyTorch nn.Linear layout; b/gamma/beta: (F,)."""
    orig_shape = x.shape
    H = orig_shape[-1]
    F = w.shape[0]
    out_dtype = x.dtype

    x2d = x.reshape(-1, H)
    M = x2d.shape[0]

    if matmul_dtype is not None:
        # Optional reduced-precision MXU path (e.g. bf16) with f32 accumulation.
        x2d = x2d.astype(matmul_dtype)
        w = w.astype(matmul_dtype)

    x_item = jnp.dtype(x2d.dtype).itemsize
    w_item = jnp.dtype(w.dtype).itemsize
    out_item = jnp.dtype(out_dtype).itemsize

    # Sublane packing of the row axis: f32 -> 8, bf16 -> 16, int8/fp8 -> 32.
    pack = max(8, 32 // max(1, x_item))
    Hp = _round_up(H, 128)
    Fp = _round_up(F, 128)

    # ---------------- VMEM budget (per-chip physical, not the 32 MiB default) -
    try:
        vmem_cap = int(pltpu.get_tpu_info().vmem_capacity_bytes)
    except Exception:
        vmem_cap = 64 << 20            # conservative (v7x per-core) fallback
    vmem_budget = max(int(vmem_cap * 0.85), 32 << 20)
    vmem_limit = vmem_budget

    # ---------------- row tile selection --------------------------------------
    tm = _round_up(min(row_tile, _round_up(M, pack)), pack)
    # Keep row-padding waste below ~12.5% (worst case previously ~2x work).
    while tm > pack and (_round_up(M, tm) - M) > max(M // 8, pack):
        tm = _round_up(max(pack, tm // 2), pack)
    # Give v7x's two TensorCores at least two row steps to split.
    if _round_up(M, tm) // tm < 2 and tm > pack:
        tm = _round_up(max(pack, tm // 2), pack)

    # ---------------- resident-weight plan vs K-tiled plan --------------------
    def resident_need(tm_):
        return (Hp * Fp * w_item                 # weight, single-buffered
                + 2 * tm_ * Hp * x_item          # x row tile (double buffer)
                + 2 * tm_ * Fp * out_item        # out row tile (double buffer)
                + 3 * Fp * 4                     # fused params
                + 3 * tm_ * Fp * 4)              # in-kernel f32 temporaries

    tm_res = tm
    while resident_need(tm_res) > vmem_budget and tm_res > pack:
        tm_res = _round_up(max(pack, tm_res // 2), pack)
    use_resident = resident_need(tm_res) <= vmem_budget

    if use_resident:
        tm = tm_res
        tk = Hp
    else:
        tk = min(512, Hp)

        def ktiled_need(tm_, tk_):
            return (2 * tk_ * Fp * w_item        # weight K tile (double buffer)
                    + 2 * tm_ * tk_ * x_item     # x tile (double buffer)
                    + 2 * tm_ * Fp * out_item    # out tile (double buffer)
                    + tm_ * Fp * 4               # accumulator scratch
                    + 3 * tm_ * Fp * 4           # f32 temporaries (epilogue)
                    + 2 * 3 * Fp * 4)            # params

        while ktiled_need(tm, tk) > vmem_budget and tk > 128:
            tk = max(128, _round_up(tk // 2, 128))
        while ktiled_need(tm, tk) > vmem_budget and tm > pack:
            tm = _round_up(max(pack, tm // 2), pack)
        Hp = _round_up(H, tk)                    # Hp must be a multiple of tk

    Mp = _round_up(M, tm)

    # ---------------- operand preparation (pad to lane-dense shapes) ----------
    if Mp != M or Hp != H:
        x2d = jnp.pad(x2d, ((0, Mp - M), (0, Hp - H)))

    wt = jnp.transpose(w)                        # (H, F) so that y = x @ wt
    if Hp != H or Fp != F:
        wt = jnp.pad(wt, ((0, Hp - H), (0, Fp - F)))

    params = jnp.stack([b, gamma, beta]).astype(jnp.float32)   # (3, F)
    if Fp != F:
        params = jnp.pad(params, ((0, 0), (0, Fp - F)))

    precision = (lax.Precision.HIGHEST
                 if jnp.dtype(x2d.dtype) == jnp.float32 else None)

    # ---------------- pallas_call builders -------------------------------------
    def run_resident(single_buffer_resident):
        kernel = functools.partial(_mlp_kernel_resident, eps=eps,
                                   f_logical=F, precision=precision)
        if single_buffer_resident:
            w_spec = pl.BlockSpec((Hp, Fp), lambda i: (0, 0),
                                  pipeline_mode=pl.Buffered(1))
            p_spec = pl.BlockSpec((3, Fp), lambda i: (0, 0),
                                  pipeline_mode=pl.Buffered(1))
        else:
            w_spec = pl.BlockSpec((Hp, Fp), lambda i: (0, 0))
            p_spec = pl.BlockSpec((3, Fp), lambda i: (0, 0))
        return pl.pallas_call(
            kernel,
            out_shape=jax.ShapeDtypeStruct((Mp, Fp), out_dtype),
            grid=(Mp // tm,),
            in_specs=[pl.BlockSpec((tm, Hp), lambda i: (i, 0)),   # x row tile
                      w_spec,                                     # resident W
                      p_spec],                                    # fused params
            out_specs=pl.BlockSpec((tm, Fp), lambda i: (i, 0)),
            compiler_params=pltpu.CompilerParams(
                dimension_semantics=("parallel",),
                vmem_limit_bytes=vmem_limit),
        )(x2d, wt, params)

    def run_ktiled():
        kernel = functools.partial(_mlp_kernel_ktiled, eps=eps,
                                   f_logical=F, precision=precision)
        return pl.pallas_call(
            kernel,
            out_shape=jax.ShapeDtypeStruct((Mp, Fp), out_dtype),
            grid=(Mp // tm, Hp // tk),
            in_specs=[pl.BlockSpec((tm, tk), lambda i, k: (i, k)),
                      pl.BlockSpec((tk, Fp), lambda i, k: (k, 0)),
                      pl.BlockSpec((3, Fp), lambda i, k: (0, 0))],
            out_specs=pl.BlockSpec((tm, Fp), lambda i, k: (i, 0)),
            scratch_shapes=[pltpu.VMEM((tm, Fp), jnp.float32)],
            compiler_params=pltpu.CompilerParams(
                dimension_semantics=("parallel", "arbitrary"),
                vmem_limit_bytes=vmem_limit),
        )(x2d, wt, params)

    if use_resident:
        try:
            out2d = run_resident(True)
        except Exception:
            # pipeline_mode / Buffered(1) unavailable: fall back to the default
            # double-buffered resident weight (same math, more VMEM).
            out2d = run_resident(False)
    else:
        out2d = run_ktiled()

    out2d = out2d[:M, :F]
    return out2d.reshape(*orig_shape[:-1], F)


def _reference(x, w, b, gamma, beta, eps=1e-5):
    y = jnp.einsum("...h,fh->...f", x, w,
                   precision=lax.Precision.HIGHEST) + b
    u = jnp.mean(y, axis=-1, keepdims=True)
    s = jnp.mean((y - u) ** 2, axis=-1, keepdims=True)
    y = (y - u) / jnp.sqrt(s + eps)
    y = gamma * y + beta
    return jnp.maximum(y, 0.0)


if __name__ == "__main__":
    key = jax.random.PRNGKey(0)
    batch, seq, hidden, out_features = 2, 8, 32, 32

    k_x, k_w, k_b = jax.random.split(key, 3)
    x = jax.random.normal(k_x, (batch, seq, hidden), dtype=jnp.float32)

    # nn.Linear-style init (uniform in +/- 1/sqrt(hidden))
    bound = 1.0 / (hidden ** 0.5)
    w = jax.random.uniform(k_w, (out_features, hidden),
                           minval=-bound, maxval=bound, dtype=jnp.float32)
    b = jax.random.uniform(k_b, (out_features,),
                           minval=-bound, maxval=bound, dtype=jnp.float32)
    # LayerNorm params as initialized in the module: weight=1, bias=0.
    gamma = jnp.ones((out_features,), dtype=jnp.float32)
    beta = jnp.zeros((out_features,), dtype=jnp.float32)

    out = mlp_forward(x, w, b, gamma, beta)
    jax.block_until_ready(out)

    ref = _reference(x, w, b, gamma, beta)
    assert out.shape == (batch, seq, out_features)
    # Tolerance covers possible MXU f32 multi-pass rounding differences.
    assert jnp.allclose(out, ref, atol=1e-2, rtol=1e-2), "mismatch vs reference"

    print("KERNEL_OK")
</pallas_src>

<mosaic_0001>
module attributes {stable_mosaic.version = 11 : i64} {
  func.func @_mlp_kernel_resident(%arg0: i32, %arg1: memref<8x128xf32, #tpu.memory_space<vmem>>, %arg2: memref<128x128xf32, #tpu.memory_space<vmem>>, %arg3: memref<3x128xf32, #tpu.memory_space<vmem>>, %arg4: memref<8x128xf32, #tpu.memory_space<vmem>>) attributes {dimension_semantics = [#tpu.dimension_semantics<parallel>], iteration_bounds = array<i64: 2>, scalar_prefetch = 0 : i64, scratch_operands = 0 : i64, tpu.core_type = #tpu.core_type<tc>, window_params = [{transform_indices = @transform_0, window_bounds = array<i64: 8, 128>}, {pipeline_mode = #tpu.pipeline_mode<synchronous>, transform_indices = @transform_1, window_bounds = array<i64: 128, 128>}, {pipeline_mode = #tpu.pipeline_mode<synchronous>, transform_indices = @transform_2, window_bounds = array<i64: 3, 128>}, {transform_indices = @transform_3, window_bounds = array<i64: 8, 128>}]} {
    %c0 = arith.constant 0 : index
    %c0_0 = arith.constant 0 : index
    %0 = vector.load %arg1[%c0, %c0_0] : memref<8x128xf32, #tpu.memory_space<vmem>>, vector<8x128xf32>
    %c0_1 = arith.constant 0 : index
    %c0_2 = arith.constant 0 : index
    %1 = vector.load %arg2[%c0_1, %c0_2] : memref<128x128xf32, #tpu.memory_space<vmem>>, vector<128x128xf32>
    %cst = arith.constant dense<0.000000e+00> : vector<8x128xf32>
    %2 = tpu.matmul %0, %1, %cst {dimension_numbers = #tpu.dot_dimension_numbers<[1], [0], [0], [1], [0, 0, 1, 1], [], []>, precision = #tpu.contract_precision<fp32>} : vector<8x128xf32>, vector<128x128xf32>, vector<8x128xf32> -> vector<8x128xf32>
    %c0_3 = arith.constant 0 : index
    %c0_4 = arith.constant 0 : index
    %3 = vector.load %arg3[%c0_3, %c0_4] : memref<3x128xf32, #tpu.memory_space<vmem>>, vector<3x128xf32>
    %4 = vector.extract_strided_slice %3 {offsets = [0, 0], sizes = [1, 128], strides = [1, 1]} : vector<3x128xf32> to vector<1x128xf32>
    %5 = vector.extract_strided_slice %3 {offsets = [1, 0], sizes = [1, 128], strides = [1, 1]} : vector<3x128xf32> to vector<1x128xf32>
    %6 = vector.extract_strided_slice %3 {offsets = [2, 0], sizes = [1, 128], strides = [1, 1]} : vector<3x128xf32> to vector<1x128xf32>
    %7 = vector.broadcast %4 : vector<1x128xf32> to vector<8x128xf32>
    %8 = arith.addf %2, %7 : vector<8x128xf32>
    %cst_5 = arith.constant dense<0.000000e+00> : vector<8xf32>
    %9 = vector.multi_reduction <add>, %8, %cst_5 [1] : vector<8x128xf32> to vector<8xf32>
    %10 = vector.shape_cast %9 : vector<8xf32> to vector<8x1xf32>
    %cst_6 = arith.constant 3.125000e-02 : f32
    %11 = vector.broadcast %cst_6 : f32 to vector<8x1xf32>
    %12 = arith.mulf %10, %11 : vector<8x1xf32>
    %13 = vector.broadcast %12 : vector<8x1xf32> to vector<8x128xf32>
    %14 = arith.subf %8, %13 : vector<8x128xf32>
    %15 = arith.mulf %14, %14 : vector<8x128xf32>
    %cst_7 = arith.constant dense<0.000000e+00> : vector<8xf32>
    %16 = vector.multi_reduction <add>, %15, %cst_7 [1] : vector<8x128xf32> to vector<8xf32>
    %17 = vector.shape_cast %16 : vector<8xf32> to vector<8x1xf32>
    %18 = arith.mulf %12, %12 : vector<8x1xf32>
    %cst_8 = arith.constant 9.600000e+01 : f32
    %19 = vector.broadcast %cst_8 : f32 to vector<8x1xf32>
    %20 = arith.mulf %19, %18 : vector<8x1xf32>
    %21 = arith.subf %17, %20 : vector<8x1xf32>
    %cst_9 = arith.constant 3.125000e-02 : f32
    %22 = vector.broadcast %cst_9 : f32 to vector<8x1xf32>
    %23 = arith.mulf %21, %22 : vector<8x1xf32>
    %cst_10 = arith.constant 9.99999974E-6 : f32
    %24 = vector.broadcast %cst_10 : f32 to vector<8x1xf32>
    %25 = arith.addf %23, %24 : vector<8x1xf32>
    %26 = math.rsqrt %25 : vector<8x1xf32>
    %27 = vector.broadcast %26 : vector<8x1xf32> to vector<8x128xf32>
    %28 = arith.mulf %14, %27 : vector<8x128xf32>
    %29 = vector.broadcast %5 : vector<1x128xf32> to vector<8x128xf32>
    %30 = arith.mulf %29, %28 : vector<8x128xf32>
    %31 = vector.broadcast %6 : vector<1x128xf32> to vector<8x128xf32>
    %32 = arith.addf %30, %31 : vector<8x128xf32>
    %cst_11 = arith.constant 0.000000e+00 : f32
    %33 = vector.broadcast %cst_11 : f32 to vector<8x128xf32>
    %34 = arith.maximumf %32, %33 : vector<8x128xf32>
    %c0_12 = arith.constant 0 : index
    %c0_13 = arith.constant 0 : index
    %35 = vector.load %arg4[%c0_12, %c0_13] : memref<8x128xf32, #tpu.memory_space<vmem>>, vector<8x128xf32>
    tpu.vector_store %arg4[%c0_12, %c0_13], %34 {strides = array<i32>} : memref<8x128xf32, #tpu.memory_space<vmem>>, vector<8x128xf32>,
    return
  }
  func.func @transform_0(%arg0: i32) -> (i32, i32) {
    %c0_i32 = arith.constant 0 : i32
    %c0_i32_0 = arith.constant 0 : i32
    return %arg0, %c0_i32 : i32, i32
  }
  func.func @transform_1(%arg0: i32) -> (i32, i32) {
    %c0_i32 = arith.constant 0 : i32
    %c0_i32_0 = arith.constant 0 : i32
    %c0_i32_1 = arith.constant 0 : i32
    return %c0_i32, %c0_i32_0 : i32, i32
  }
  func.func @transform_2(%arg0: i32) -> (i32, i32) {
    %c0_i32 = arith.constant 0 : i32
    %c0_i32_0 = arith.constant 0 : i32
    %c0_i32_1 = arith.constant 0 : i32
    return %c0_i32, %c0_i32_0 : i32, i32
  }
  func.func @transform_3(%arg0: i32) -> (i32, i32) {
    %c0_i32 = arith.constant 0 : i32
    %c0_i32_0 = arith.constant 0 : i32
    return %arg0, %c0_i32 : i32, i32
  }
}

module attributes {stable_mosaic.version = 11 : i64} {
  func.func @_mlp_kernel_resident(%arg0: i32, %arg1: memref<8x128xf32, #tpu.memory_space<vmem>>, %arg2: memref<128x128xf32, #tpu.memory_space<vmem>>, %arg3: memref<3x128xf32, #tpu.memory_space<vmem>>, %arg4: memref<8x128xf32, #tpu.memory_space<vmem>>) attributes {dimension_semantics = [#tpu.dimension_semantics<parallel>], iteration_bounds = array<i64: 2>, scalar_prefetch = 0 : i64, scratch_operands = 0 : i64, tpu.core_type = #tpu.core_type<tc>, window_params = [{transform_indices = @transform_0, window_bounds = array<i64: 8, 128>}, {pipeline_mode = #tpu.pipeline_mode<synchronous>, transform_indices = @transform_1, window_bounds = array<i64: 128, 128>}, {pipeline_mode = #tpu.pipeline_mode<synchronous>, transform_indices = @transform_2, window_bounds = array<i64: 3, 128>}, {transform_indices = @transform_3, window_bounds = array<i64: 8, 128>}]} {
    %c0 = arith.constant 0 : index
    %c0_0 = arith.constant 0 : index
    %0 = vector.load %arg1[%c0, %c0_0] : memref<8x128xf32, #tpu.memory_space<vmem>>, vector<8x128xf32>
    %c0_1 = arith.constant 0 : index
    %c0_2 = arith.constant 0 : index
    %1 = vector.load %arg2[%c0_1, %c0_2] : memref<128x128xf32, #tpu.memory_space<vmem>>, vector<128x128xf32>
    %cst = arith.constant dense<0.000000e+00> : vector<8x128xf32>
    %2 = tpu.matmul %0, %1, %cst {dimension_numbers = #tpu.dot_dimension_numbers<[1], [0], [0], [1], [0, 0, 1, 1], [], []>, precision = #tpu.contract_precision<fp32>} : vector<8x128xf32>, vector<128x128xf32>, vector<8x128xf32> -> vector<8x128xf32>
    %c0_3 = arith.constant 0 : index
    %c0_4 = arith.constant 0 : index
    %3 = vector.load %arg3[%c0_3, %c0_4] : memref<3x128xf32, #tpu.memory_space<vmem>>, vector<3x128xf32>
    %4 = vector.extract_strided_slice %3 {offsets = [0, 0], sizes = [1, 128], strides = [1, 1]} : vector<3x128xf32> to vector<1x128xf32>
    %5 = vector.extract_strided_slice %3 {offsets = [1, 0], sizes = [1, 128], strides = [1, 1]} : vector<3x128xf32> to vector<1x128xf32>
    %6 = vector.extract_strided_slice %3 {offsets = [2, 0], sizes = [1, 128], strides = [1, 1]} : vector<3x128xf32> to vector<1x128xf32>
    %7 = vector.broadcast %4 : vector<1x128xf32> to vector<8x128xf32>
    %8 = arith.addf %2, %7 : vector<8x128xf32>
    %cst_5 = arith.constant dense<0.000000e+00> : vector<8xf32>
    %9 = vector.multi_reduction <add>, %8, %cst_5 [1] : vector<8x128xf32> to vector<8xf32>
    %10 = vector.shape_cast %9 : vector<8xf32> to vector<8x1xf32>
    %cst_6 = arith.constant 3.125000e-02 : f32
    %11 = vector.broadcast %cst_6 : f32 to vector<8x1xf32>
    %12 = arith.mulf %10, %11 : vector<8x1xf32>
    %13 = vector.broadcast %12 : vector<8x1xf32> to vector<8x128xf32>
    %14 = arith.subf %8, %13 : vector<8x128xf32>
    %15 = arith.mulf %14, %14 : vector<8x128xf32>
    %cst_7 = arith.constant dense<0.000000e+00> : vector<8xf32>
    %16 = vector.multi_reduction <add>, %15, %cst_7 [1] : vector<8x128xf32> to vector<8xf32>
    %17 = vector.shape_cast %16 : vector<8xf32> to vector<8x1xf32>
    %18 = arith.mulf %12, %12 : vector<8x1xf32>
    %cst_8 = arith.constant 9.600000e+01 : f32
    %19 = vector.broadcast %cst_8 : f32 to vector<8x1xf32>
    %20 = arith.mulf %19, %18 : vector<8x1xf32>
    %21 = arith.subf %17, %20 : vector<8x1xf32>
    %cst_9 = arith.constant 3.125000e-02 : f32
    %22 = vector.broadcast %cst_9 : f32 to vector<8x1xf32>
    %23 = arith.mulf %21, %22 : vector<8x1xf32>
    %cst_10 = arith.constant 9.99999974E-6 : f32
    %24 = vector.broadcast %cst_10 : f32 to vector<8x1xf32>
    %25 = arith.addf %23, %24 : vector<8x1xf32>
    %26 = math.rsqrt %25 : vector<8x1xf32>
    %27 = vector.broadcast %26 : vector<8x1xf32> to vector<8x128xf32>
    %28 = arith.mulf %14, %27 : vector<8x128xf32>
    %29 = vector.broadcast %5 : vector<1x128xf32> to vector<8x128xf32>
    %30 = arith.mulf %29, %28 : vector<8x128xf32>
    %31 = vector.broadcast %6 : vector<1x128xf32> to vector<8x128xf32>
    %32 = arith.addf %30, %31 : vector<8x128xf32>
    %cst_11 = arith.constant 0.000000e+00 : f32
    %33 = vector.broadcast %cst_11 : f32 to vector<8x128xf32>
    %34 = arith.maximumf %32, %33 : vector<8x128xf32>
    %c0_12 = arith.constant 0 : index
    %c0_13 = arith.constant 0 : index
    %35 = vector.load %arg4[%c0_12, %c0_13] : memref<8x128xf32, #tpu.memory_space<vmem>>, vector<8x128xf32>
    tpu.vector_store %arg4[%c0_12, %c0_13], %34 {strides = array<i32>} : memref<8x128xf32, #tpu.memory_space<vmem>>, vector<8x128xf32>,
    return
  }
  func.func @transform_0(%arg0: i32) -> (i32, i32) {
    %c0_i32 = arith.constant 0 : i32
    %c0_i32_0 = arith.constant 0 : i32
    return %arg0, %c0_i32 : i32, i32
  }
  func.func @transform_1(%arg0: i32) -> (i32, i32) {
    %c0_i32 = arith.constant 0 : i32
    %c0_i32_0 = arith.constant 0 : i32
    %c0_i32_1 = arith.constant 0 : i32
    return %c0_i32, %c0_i32_0 : i32, i32
  }
  func.func @transform_2(%arg0: i32) -> (i32, i32) {
    %c0_i32 = arith.constant 0 : i32
    %c0_i32_0 = arith.constant 0 : i32
    %c0_i32_1 = arith.constant 0 : i32
    return %c0_i32, %c0_i32_0 : i32, i32
  }
  func.func @transform_3(%arg0: i32) -> (i32, i32) {
    %c0_i32 = arith.constant 0 : i32
    %c0_i32_0 = arith.constant 0 : i32
    return %arg0, %c0_i32 : i32, i32
  }
}

</mosaic_0001>

<llo_original>
// kernel: tpu_custom_call.1
$region0: #{tpu_custom_call.1}
  #allocation0 [shape = 'u32[]', space=smem, size = 0x4, offset = 0x4, fixed_abs, tag = 'smem constant byte address 0x4 - core index']
  #allocation1 [shape = 'u32[72,128]{1,0:T(1,128)}', space=vmem, size = 0x9000, scoped, tag = 'internal scratch']
  %s0 = inlined_call_operand.hbm [shape: f32[16,128], index: 0, kind: input, shape index: {}]
  %s1 = inlined_call_operand.hbm [shape: f32[128,128], index: 1, kind: input, shape index: {}]
  %s2 = inlined_call_operand.hbm [shape: f32[3,128], index: 2, kind: input, shape index: {}]
  %s3 = inlined_call_operand.hbm [shape: f32[16,128], index: 3, kind: output, shape index: {}]
  %s4 = sld [smem:[#allocation0]]
  $region57: #{tpu_custom_call.1} parent=0
    _
  %s6 = ssub.s32 1, %s4
  %s7 = scalar_select 0, %s6, %s4
  $region1: #{tpu_custom_call.1} parent=0
    #allocation2 [shape = 'u8[8192]{0}', space=vmem, size = 0x2000, scoped, tag = 'input window, operand 0']
    #allocation3 [shape = 's32[2]{0}', space=sflag, size = 0x8, scoped, tag = 'scoped memory for tpu_custom_call.1']
    #allocation4 [shape = 's32[2]{0}', space=sflag, size = 0x8, scoped, tag = 'scoped memory for tpu_custom_call.1']
    #allocation5 [shape = 'u8[65536]{0}', space=vmem, size = 0x10000, scoped, tag = 'input window, operand 1, single buffered']
    #allocation6 [shape = 's32[1]{0}', space=sflag, size = 0x4, scoped, tag = 'scoped memory for tpu_custom_call.1']
    #allocation7 [shape = 'u8[2048]{0}', space=vmem, size = 0x800, scoped, tag = 'input window, operand 2, single buffered']
    #allocation8 [shape = 'u8[8192]{0}', space=vmem, size = 0x2000, scoped, tag = 'output window, operand 0']
    %8 = vsyncpa [#allocation3], 0
    %s9 = scalar_lea.sflag [#allocation3], 1
    %10 = vsyncpa %s9, 0
    %11 = vsyncpa [#allocation6], 0
    %12 = vsyncpa [#allocation4], 0
    %s13 = scalar_lea.sflag [#allocation4], 1
    %14 = vsyncpa %s13, 0
    loop: start=0, step=1, limit=4
    $region2: #{tpu_custom_call.1} parent=1 // loop_pre_header
      _
    $region3: #{tpu_custom_call.1} parent=1 // loop_header
      %s16 = sphi 0, %s20
      %p17 = scmp.ge.s32.totalorder %s16, 4
      %s26 = sphi 0, %s28
      %s29 = sphi 0, %s26
      %s30 = sphi 0, %s29
      %s46 = sphi 0, %s30
      %s50 = sphi 0, %s50
      %s52 = sphi 0, %s50
      %s53 = sphi 0, %s52
      %s67 = sphi 0, %s53
      %s71 = sphi 0, %s71
      %s73 = sphi 0, %s71
      %s74 = sphi 0, %s73
      %s88 = sphi 0, %s74
      %s94 = sphi 0, %s96
      %s97 = sphi 0, %s94
      %s98 = sphi 0, %s97
      %s114 = sphi 0, %s98
    $region4: #{tpu_custom_call.1} parent=1 // loop_header_branch
      %19 = sbr.rel (%p17) target = $region8
    $region5: #{tpu_custom_call.1} parent=1 // loop_body
      %s21 = ssub.s32 %s16, 1
      %s22 = ssub.s32 %s16, 2
      %s23 = sadd.s32 %s16, 1
      %s24 = ssub.s32 %s16, %s23
      %p25 = scmp.eq.s32.totalorder %s24, 0
      %s27 = sadd.s32 %s26, 1
      %s28 = scalar_select %p25, %s26, %s27
      %p31 = pneg %p25
      %p32 = scmp.eq.s32.totalorder %s16, 1
      %p33 = por %p31, %p32
      %p34 = scmp.ne.s32.totalorder %s26, %s29
      %p35 = scmp.eq.s32.totalorder %s16, 0
      %p36 = por %p34, %p35
      %p37 = scmp.ne.s32.totalorder %s26, %s29
      %p38 = scmp.eq.s32.totalorder %s21, 1
      %p39 = por %p37, %p38
      %p40 = scmp.ne.s32.totalorder %s29, %s30
      %p41 = scmp.eq.s32.totalorder %s21, 0
      %p42 = por %p40, %p41
      %p43 = scmp.ne.s32.totalorder %s29, %s30
      %p44 = scmp.eq.s32.totalorder %s22, 1
      %p45 = por %p43, %p44
      %p47 = scmp.ne.s32.totalorder %s30, %s46
      %p48 = scmp.eq.s32.totalorder %s22, 0
      %p49 = por %p47, %p48
      %s51 = sadd.s32 %s50, 1
      %p54 = scmp.eq.s32.totalorder %s16, 1
      %p55 = scmp.ne.s32.totalorder %s50, %s52
      %p56 = scmp.eq.s32.totalorder %s16, 0
      %p57 = por %p55, %p56
      %p58 = scmp.ne.s32.totalorder %s50, %s52
      %p59 = scmp.eq.s32.totalorder %s21, 1
      %p60 = por %p58, %p59
      %p61 = scmp.ne.s32.totalorder %s52, %s53
      %p62 = scmp.eq.s32.totalorder %s21, 0
      %p63 = por %p61, %p62
      %p64 = scmp.ne.s32.totalorder %s52, %s53
      %p65 = scmp.eq.s32.totalorder %s22, 1
      %p66 = por %p64, %p65
      %p68 = scmp.ne.s32.totalorder %s53, %s67
      %p69 = scmp.eq.s32.totalorder %s22, 0
      %p70 = por %p68, %p69
      %s72 = sadd.s32 %s71, 1
      %p75 = scmp.eq.s32.totalorder %s16, 1
      %p76 = scmp.ne.s32.totalorder %s71, %s73
      %p77 = scmp.eq.s32.totalorder %s16, 0
      %p78 = por %p76, %p77
      %p79 = scmp.ne.s32.totalorder %s71, %s73
      %p80 = scmp.eq.s32.totalorder %s21, 1
      %p81 = por %p79, %p80
      %p82 = scmp.ne.s32.totalorder %s73, %s74
      %p83 = scmp.eq.s32.totalorder %s21, 0
      %p84 = por %p82, %p83
      %p85 = scmp.ne.s32.totalorder %s73, %s74
      %p86 = scmp.eq.s32.totalorder %s22, 1
      %p87 = por %p85, %p86
      %p89 = scmp.ne.s32.totalorder %s74, %s88
      %p90 = scmp.eq.s32.totalorder %s22, 0
      %p91 = por %p89, %p90
      %s92 = ssub.s32 %s16, %s23
      %p93 = scmp.eq.s32.totalorder %s92, 0
      %s95 = sadd.s32 %s94, 1
      %s96 = scalar_select %p93, %s94, %s95
      %p99 = pneg %p93
      %p100 = scmp.eq.s32.totalorder %s16, 1
      %p101 = por %p99, %p100
      %p102 = scmp.ne.s32.totalorder %s94, %s97
      %p103 = scmp.eq.s32.totalorder %s16, 0
      %p104 = por %p102, %p103
      %p105 = scmp.ne.s32.totalorder %s94, %s97
      %p106 = scmp.eq.s32.totalorder %s21, 1
      %p107 = por %p105, %p106
      %p108 = scmp.ne.s32.totalorder %s97, %s98
      %p109 = scmp.eq.s32.totalorder %s21, 0
      %p110 = por %p108, %p109
      %p111 = scmp.ne.s32.totalorder %s97, %s98
      %p112 = scmp.eq.s32.totalorder %s22, 1
      %p113 = por %p111, %p112
      %p115 = scmp.ne.s32.totalorder %s98, %s114
      %p116 = scmp.eq.s32.totalorder %s22, 0
      %p117 = por %p115, %p116
      %p118 = scmp.le.s32.totalorder 1, %s16
      %p119 = scmp.lt.s32.totalorder %s16, 3
      %p120 = pnand %p118, %p119
      %p121 = pneg %p120
      // Predicated region
      $region9: #{tpu_custom_call.1} parent=5 // pred_check
        _
      $region10: #{tpu_custom_call.1} parent=5 // pred_check_branch
        %123 = sbr.rel (%p120) target = $region12
      $region11: #{tpu_custom_call.1} parent=5 // pred_region
        %s124 = ssub.s32 %s16, 1
        // Predicated region
        $region13: #{tpu_custom_call.1} parent=11 // pred_check
          %p125 = pneg %p63
        $region14: #{tpu_custom_call.1} parent=11 // pred_check_branch
          %127 = sbr.rel (%p125) target = $region16
        $region15: #{tpu_custom_call.1} parent=11 // pred_region
          %129 = vsyncadd [#allocation6], 0
          %s130 = sshll.u32 %s1, 4
          %s131 = int_to_ptr.hbm [resolvable:$true] %s130
          %s132 = sshll.u32 [#allocation5], 4
          %s133 = int_to_ptr.vmem [resolvable:$true] %s132
          %138 = dma.hbm_to_vmem [thread:$0]  %s131, 2048, %s133, [#allocation6], 128, 128, 8
        $region16: #{tpu_custom_call.1} parent=11 // pred_fallthru
          _
        // Predicated region
        $region17: #{tpu_custom_call.1} parent=11 // pred_check
          %p139 = pneg %p84
        $region18: #{tpu_custom_call.1} parent=11 // pred_check_branch
          %141 = sbr.rel (%p139) target = $region20
        $region19: #{tpu_custom_call.1} parent=11 // pred_region
          %143 = vsyncadd [#allocation6], 0
          %s145 = sshll.u32 %s2, 4
          %s146 = int_to_ptr.hbm [resolvable:$true] %s145
          %s147 = sshll.u32 [#allocation7], 4
          %s148 = int_to_ptr.vmem [resolvable:$true] %s147
          %150 = dma.hbm_to_vmem [thread:$0]  %s146, 64, %s148, [#allocation6]
        $region20: #{tpu_custom_call.1} parent=11 // pred_fallthru
          _
      $region12: #{tpu_custom_call.1} parent=5 // pred_fallthru
        _
      %p151 = scmp.lt.s32.totalorder %s16, 2
      // Predicated region
      $region21: #{tpu_custom_call.1} parent=5 // pred_check
        %p152 = pneg %p151
      $region22: #{tpu_custom_call.1} parent=5 // pred_check_branch
        %154 = sbr.rel (%p152) target = $region24
      $region23: #{tpu_custom_call.1} parent=5 // pred_region
        // Predicated region
        $region25: #{tpu_custom_call.1} parent=23 // pred_check
          %p155 = pneg %p36
        $region26: #{tpu_custom_call.1} parent=23 // pred_check_branch
          %157 = sbr.rel (%p155) target = $region28
        $region27: #{tpu_custom_call.1} parent=23 // pred_region
          %s158 = sand.u32 %s26, 1
          %s159 = scalar_lea.sflag [#allocation3], %s158
          %s160 = sand.u32 %s26, 1
          %s161 = smul.addr %s160, 8
          %s162 = scalar_lea.vmem [#allocation2], %s161
          %164 = vsyncadd %s159, 0
          %s165 = smul.addr %s16, 8
          %s166 = scalar_lea.hbm %s0, %s165
          %s168 = sshll.u32 %s166, 4
          %s169 = int_to_ptr.hbm [resolvable:$true] %s168
          %s170 = sshll.u32 %s162, 4
          %s171 = int_to_ptr.vmem [resolvable:$true] %s170
          %173 = dma.hbm_to_vmem [thread:$0]  %s169, 128, %s171, %s159
        $region28: #{tpu_custom_call.1} parent=23 // pred_fallthru
          _
      $region24: #{tpu_custom_call.1} parent=5 // pred_fallthru
        _
      %p174 = scmp.le.s32.totalorder 1, %s16
      %p175 = scmp.lt.s32.totalorder %s16, 3
      %p176 = pnand %p174, %p175
      %p177 = pneg %p176
      // Predicated region
      $region29: #{tpu_custom_call.1} parent=5 // pred_check
        _
      $region30: #{tpu_custom_call.1} parent=5 // pred_check_branch
        %179 = sbr.rel (%p176) target = $region32
      $region31: #{tpu_custom_call.1} parent=5 // pred_region
        %s180 = ssub.s32 %s16, 1
        %s181 = sand.u32 %s29, 1
        %s182 = scalar_lea.sflag [#allocation3], %s181
        %s183 = sand.u32 %s29, 1
        %s184 = smul.addr %s183, 8
        %s185 = scalar_lea.vmem [#allocation2], %s184
        // Predicated region
        $region33: #{tpu_custom_call.1} parent=31 // pred_check
          %p186 = pneg %p42
        $region34: #{tpu_custom_call.1} parent=31 // pred_check_branch
          %188 = sbr.rel (%p186) target = $region36
        $region35: #{tpu_custom_call.1} parent=31 // pred_region
          %190 = dma.done %s182, 128
        $region36: #{tpu_custom_call.1} parent=31 // pred_fallthru
          _
        // Predicated region
        $region37: #{tpu_custom_call.1} parent=31 // pred_check
          %p191 = pneg %p63
        $region38: #{tpu_custom_call.1} parent=31 // pred_check_branch
          %193 = sbr.rel (%p191) target = $region40
        $region39: #{tpu_custom_call.1} parent=31 // pred_region
          %195 = dma.done [#allocation6], 2048
        $region40: #{tpu_custom_call.1} parent=31 // pred_fallthru
          _
        // Predicated region
        $region41: #{tpu_custom_call.1} parent=31 // pred_check
          %p196 = pneg %p84
        $region42: #{tpu_custom_call.1} parent=31 // pred_check_branch
          %198 = sbr.rel (%p196) target = $region44
        $region43: #{tpu_custom_call.1} parent=31 // pred_region
          %200 = dma.done [#allocation6], 64
        $region44: #{tpu_custom_call.1} parent=31 // pred_fallthru
          _
        %s201 = sand.u32 %s29, 1
        %s202 = scalar_lea.sflag [#allocation3], %s201
        %s203 = sand.u32 %s29, 1
        %s204 = smul.addr %s203, 8
        %s205 = scalar_lea.vmem [#allocation2], %s204
        %p206 = pneg %p42
        %p207 = pneg %p39
        %p208 = pneg %p63
        %p209 = pneg %p60
        %p210 = pneg %p84
        %p211 = pneg %p81
        %p212 = pneg %p110
        %p213 = pneg %p107
        %s214 = sand.u32 %s97, 1
        %s215 = scalar_lea.sflag [#allocation4], %s214
        %s216 = sand.u32 %s97, 1
        %s217 = smul.addr %s216, 8
        %s218 = scalar_lea.vmem [#allocation8], %s217
        %v219 = vld [vmem:[%s185] sm:$0xff]
        %v220 = vld [vmem:[#allocation5] sm:$0xff]
        %v221 = vld [vmem:[#allocation5 + $0x8] sm:$0xff]
        %v222 = vld [vmem:[#allocation5 + $0x10] sm:$0xff]
        %v223 = vld [vmem:[#allocation5 + $0x18] sm:$0xff]
        %v224 = vld [vmem:[#allocation5 + $0x20] sm:$0xff]
        %v225 = vld [vmem:[#allocation5 + $0x28] sm:$0xff]
        %v226 = vld [vmem:[#allocation5 + $0x30] sm:$0xff]
        %v227 = vld [vmem:[#allocation5 + $0x38] sm:$0xff]
        %v228 = vld [vmem:[#allocation5 + $0x40] sm:$0xff]
        %v229 = vld [vmem:[#allocation5 + $0x48] sm:$0xff]
        %v230 = vld [vmem:[#allocation5 + $0x50] sm:$0xff]
        %v231 = vld [vmem:[#allocation5 + $0x58] sm:$0xff]
        %v232 = vld [vmem:[#allocation5 + $0x60] sm:$0xff]
        %v233 = vld [vmem:[#allocation5 + $0x68] sm:$0xff]
        %v234 = vld [vmem:[#allocation5 + $0x70] sm:$0xff]
        %v235 = vld [vmem:[#allocation5 + $0x78] sm:$0xff]
        %v236 = vld [vmem:[#allocation7] sm:$0x7]
        %v237 = vperm.slane %v236, 0
        %v238 = vand.u32 %v235, 4294901760
        %239 = vmatpush.msra.mxu0 %v238
        %v240 = vand.u32 %v234, 4294901760
        %241 = vmatpush.msra.mxu0 %v240
        %v242 = vand.u32 %v233, 4294901760
        %243 = vmatpush.msra.mxu0 %v242
        %v244 = vand.u32 %v232, 4294901760
        %245 = vmatpush.msra.mxu0 %v244
        %v246 = vand.u32 %v231, 4294901760
        %247 = vmatpush.msra.mxu0 %v246
        %v248 = vand.u32 %v230, 4294901760
        %249 = vmatpush.msra.mxu0 %v248
        %v250 = vand.u32 %v229, 4294901760
        %251 = vmatpush.msra.mxu0 %v250
        %v252 = vand.u32 %v228, 4294901760
        %253 = vmatpush.msra.mxu0 %v252
        %v254 = vand.u32 %v227, 4294901760
        %255 = vmatpush.msra.mxu0 %v254
        %v256 = vand.u32 %v226, 4294901760
        %257 = vmatpush.msra.mxu0 %v256
        %v258 = vand.u32 %v225, 4294901760
        %259 = vmatpush.msra.mxu0 %v258
        %v260 = vand.u32 %v224, 4294901760
        %261 = vmatpush.msra.mxu0 %v260
        %v262 = vand.u32 %v223, 4294901760
        %263 = vmatpush.msra.mxu0 %v262
        %v264 = vand.u32 %v222, 4294901760
        %265 = vmatpush.msra.mxu0 %v264
        %v266 = vand.u32 %v221, 4294901760
        %267 = vmatpush.msra.mxu0 %v266
        %v268 = vand.u32 %v220, 4294901760
        %269 = vmatpush.msra.mxu0 %v268
        %v270 = vand.u32 %v219, 4294901760
        %v271 = vsub.f32 %v219, %v270
        %v272 = vand.u32 %v271, 4294901760
        %v273 = vsub.f32 %v271, %v272
        %v274 = vand.u32 %v273, 4294901760
        %275 = vmatmul.f32.gmra.mxu0 %v274
        %v276 = vpop.f32.mrf.mxu0
        %v277 = vadd.f32 %v237, %v276
        %278 = vdwg.mxu0
        %v279 = vand.u32 %v235, 4294901760
        %v280 = vsub.f32 %v235, %v279
        %v281 = vand.u32 %v280, 4294901760
        %v282 = vsub.f32 %v280, %v281
        %v283 = vand.u32 %v282, 4294901760
        %284 = vmatpush.msra.mxu0 %v283
        %v285 = vand.u32 %v234, 4294901760
        %v286 = vsub.f32 %v234, %v285
        %v287 = vand.u32 %v286, 4294901760
        %v288 = vsub.f32 %v286, %v287
        %v289 = vand.u32 %v288, 4294901760
        %290 = vmatpush.msra.mxu0 %v289
        %v291 = vand.u32 %v233, 4294901760
        %v292 = vsub.f32 %v233, %v291
        %v293 = vand.u32 %v292, 4294901760
        %v294 = vsub.f32 %v292, %v293
        %v295 = vand.u32 %v294, 4294901760
        %296 = vmatpush.msra.mxu0 %v295
        %v297 = vand.u32 %v232, 4294901760
        %v298 = vsub.f32 %v232, %v297
        %v299 = vand.u32 %v298, 4294901760
        %v300 = vsub.f32 %v298, %v299
        %v301 = vand.u32 %v300, 4294901760
        %302 = vmatpush.msra.mxu0 %v301
        %v303 = vand.u32 %v231, 4294901760
        %v304 = vsub.f32 %v231, %v303
        %v305 = vand.u32 %v304, 4294901760
        %v306 = vsub.f32 %v304, %v305
        %v307 = vand.u32 %v306, 4294901760
        %308 = vmatpush.msra.mxu0 %v307
        %v309 = vand.u32 %v230, 4294901760
        %v310 = vsub.f32 %v230, %v309
        %v311 = vand.u32 %v310, 4294901760
        %v312 = vsub.f32 %v310, %v311
        %v313 = vand.u32 %v312, 4294901760
        %314 = vmatpush.msra.mxu0 %v313
        %v315 = vand.u32 %v229, 4294901760
        %v316 = vsub.f32 %v229, %v315
        %v317 = vand.u32 %v316, 4294901760
        %v318 = vsub.f32 %v316, %v317
        %v319 = vand.u32 %v318, 4294901760
        %320 = vmatpush.msra.mxu0 %v319
        %v321 = vand.u32 %v228, 4294901760
        %v322 = vsub.f32 %v228, %v321
        %v323 = vand.u32 %v322, 4294901760
        %v324 = vsub.f32 %v322, %v323
        %v325 = vand.u32 %v324, 4294901760
        %326 = vmatpush.msra.mxu0 %v325
        %v327 = vand.u32 %v227, 4294901760
        %v328 = vsub.f32 %v227, %v327
        %v329 = vand.u32 %v328, 4294901760
        %v330 = vsub.f32 %v328, %v329
        %v331 = vand.u32 %v330, 4294901760
        %332 = vmatpush.msra.mxu0 %v331
        %v333 = vand.u32 %v226, 4294901760
        %v334 = vsub.f32 %v226, %v333
        %v335 = vand.u32 %v334, 4294901760
        %v336 = vsub.f32 %v334, %v335
        %v337 = vand.u32 %v336, 4294901760
        %338 = vmatpush.msra.mxu0 %v337
        %v339 = vand.u32 %v225, 4294901760
        %v340 = vsub.f32 %v225, %v339
        %v341 = vand.u32 %v340, 4294901760
        %v342 = vsub.f32 %v340, %v341
        %v343 = vand.u32 %v342, 4294901760
        %344 = vmatpush.msra.mxu0 %v343
        %v345 = vand.u32 %v224, 4294901760
        %v346 = vsub.f32 %v224, %v345
        %v347 = vand.u32 %v346, 4294901760
        %v348 = vsub.f32 %v346, %v347
        %v349 = vand.u32 %v348, 4294901760
        %350 = vmatpush.msra.mxu0 %v349
        %v351 = vand.u32 %v223, 4294901760
        %v352 = vsub.f32 %v223, %v351
        %v353 = vand.u32 %v352, 4294901760
        %v354 = vsub.f32 %v352, %v353
        %v355 = vand.u32 %v354, 4294901760
        %356 = vmatpush.msra.mxu0 %v355
        %v357 = vand.u32 %v222, 4294901760
        %v358 = vsub.f32 %v222, %v357
        %v359 = vand.u32 %v358, 4294901760
        %v360 = vsub.f32 %v358, %v359
        %v361 = vand.u32 %v360, 4294901760
        %362 = vmatpush.msra.mxu0 %v361
        %v363 = vand.u32 %v221, 4294901760
        %v364 = vsub.f32 %v221, %v363
        %v365 = vand.u32 %v364, 4294901760
        %v366 = vsub.f32 %v364, %v365
        %v367 = vand.u32 %v366, 4294901760
        %368 = vmatpush.msra.mxu0 %v367
        %v369 = vand.u32 %v220, 4294901760
        %v370 = vsub.f32 %v220, %v369
        %v371 = vand.u32 %v370, 4294901760
        %v372 = vsub.f32 %v370, %v371
        %v373 = vand.u32 %v372, 4294901760
        %374 = vmatpush.msra.mxu0 %v373
        %v375 = vand.u32 %v219, 4294901760
        %376 = vmatmul.f32.gmra.mxu0 %v375
        %v377 = vpop.f32.mrf.mxu0
        %v378 = vadd.f32 %v277, %v377
        %379 = vdwg.mxu0
        %v380 = vand.u32 %v235, 4294901760
        %v381 = vsub.f32 %v235, %v380
        %382 = vmatpush.msra.mxu0 %v381
        %v383 = vand.u32 %v234, 4294901760
        %v384 = vsub.f32 %v234, %v383
        %385 = vmatpush.msra.mxu0 %v384
        %v386 = vand.u32 %v233, 4294901760
        %v387 = vsub.f32 %v233, %v386
        %388 = vmatpush.msra.mxu0 %v387
        %v389 = vand.u32 %v232, 4294901760
        %v390 = vsub.f32 %v232, %v389
        %391 = vmatpush.msra.mxu0 %v390
        %v392 = vand.u32 %v231, 4294901760
        %v393 = vsub.f32 %v231, %v392
        %394 = vmatpush.msra.mxu0 %v393
        %v395 = vand.u32 %v230, 4294901760
        %v396 = vsub.f32 %v230, %v395
        %397 = vmatpush.msra.mxu0 %v396
        %v398 = vand.u32 %v229, 4294901760
        %v399 = vsub.f32 %v229, %v398
        %400 = vmatpush.msra.mxu0 %v399
        %v401 = vand.u32 %v228, 4294901760
        %v402 = vsub.f32 %v228, %v401
        %403 = vmatpush.msra.mxu0 %v402
        %v404 = vand.u32 %v227, 4294901760
        %v405 = vsub.f32 %v227, %v404
        %406 = vmatpush.msra.mxu0 %v405
        %v407 = vand.u32 %v226, 4294901760
        %v408 = vsub.f32 %v226, %v407
        %409 = vmatpush.msra.mxu0 %v408
        %v410 = vand.u32 %v225, 4294901760
        %v411 = vsub.f32 %v225, %v410
        %412 = vmatpush.msra.mxu0 %v411
        %v413 = vand.u32 %v224, 4294901760
        %v414 = vsub.f32 %v224, %v413
        %415 = vmatpush.msra.mxu0 %v414
        %v416 = vand.u32 %v223, 4294901760
        %v417 = vsub.f32 %v223, %v416
        %418 = vmatpush.msra.mxu0 %v417
        %v419 = vand.u32 %v222, 4294901760
        %v420 = vsub.f32 %v222, %v419
        %421 = vmatpush.msra.mxu0 %v420
        %v422 = vand.u32 %v221, 4294901760
        %v423 = vsub.f32 %v221, %v422
        %424 = vmatpush.msra.mxu0 %v423
        %v425 = vand.u32 %v220, 4294901760
        %v426 = vsub.f32 %v220, %v425
        %427 = vmatpush.msra.mxu0 %v426
        %v428 = vand.u32 %v219, 4294901760
        %v429 = vsub.f32 %v219, %v428
        %430 = vmatmul.f32.gmra.mxu0 %v429
        %v431 = vpop.f32.mrf.mxu0
        %v432 = vadd.f32 %v378, %v431
        %433 = vdwg.mxu0
        %v434 = vand.u32 %v235, 4294901760
        %435 = vmatpush.msra.mxu0 %v434
        %v436 = vand.u32 %v234, 4294901760
        %437 = vmatpush.msra.mxu0 %v436
        %v438 = vand.u32 %v233, 4294901760
        %439 = vmatpush.msra.mxu0 %v438
        %v440 = vand.u32 %v232, 4294901760
        %441 = vmatpush.msra.mxu0 %v440
        %v442 = vand.u32 %v231, 4294901760
        %443 = vmatpush.msra.mxu0 %v442
        %v444 = vand.u32 %v230, 4294901760
        %445 = vmatpush.msra.mxu0 %v444
        %v446 = vand.u32 %v229, 4294901760
        %447 = vmatpush.msra.mxu0 %v446
        %v448 = vand.u32 %v228, 4294901760
        %449 = vmatpush.msra.mxu0 %v448
        %v450 = vand.u32 %v227, 4294901760
        %451 = vmatpush.msra.mxu0 %v450
        %v452 = vand.u32 %v226, 4294901760
        %453 = vmatpush.msra.mxu0 %v452
        %v454 = vand.u32 %v225, 4294901760
        %455 = vmatpush.msra.mxu0 %v454
        %v456 = vand.u32 %v224, 4294901760
        %457 = vmatpush.msra.mxu0 %v456
        %v458 = vand.u32 %v223, 4294901760
        %459 = vmatpush.msra.mxu0 %v458
        %v460 = vand.u32 %v222, 4294901760
        %461 = vmatpush.msra.mxu0 %v460
        %v462 = vand.u32 %v221, 4294901760
        %463 = vmatpush.msra.mxu0 %v462
        %v464 = vand.u32 %v220, 4294901760
        %465 = vmatpush.msra.mxu0 %v464
        %v466 = vand.u32 %v219, 4294901760
        %v467 = vsub.f32 %v219, %v466
        %v468 = vand.u32 %v467, 4294901760
        %469 = vmatmul.f32.gmra.mxu0 %v468
        %v470 = vpop.f32.mrf.mxu0
        %v471 = vadd.f32 %v432, %v470
        %472 = vdwg.mxu0
        %v473 = vand.u32 %v235, 4294901760
        %v474 = vsub.f32 %v235, %v473
        %v475 = vand.u32 %v474, 4294901760
        %476 = vmatpush.msra.mxu0 %v475
        %v477 = vand.u32 %v234, 4294901760
        %v478 = vsub.f32 %v234, %v477
        %v479 = vand.u32 %v478, 4294901760
        %480 = vmatpush.msra.mxu0 %v479
        %v481 = vand.u32 %v233, 4294901760
        %v482 = vsub.f32 %v233, %v481
        %v483 = vand.u32 %v482, 4294901760
        %484 = vmatpush.msra.mxu0 %v483
        %v485 = vand.u32 %v232, 4294901760
        %v486 = vsub.f32 %v232, %v485
        %v487 = vand.u32 %v486, 4294901760
        %488 = vmatpush.msra.mxu0 %v487
        %v489 = vand.u32 %v231, 4294901760
        %v490 = vsub.f32 %v231, %v489
        %v491 = vand.u32 %v490, 4294901760
        %492 = vmatpush.msra.mxu0 %v491
        %v493 = vand.u32 %v230, 4294901760
        %v494 = vsub.f32 %v230, %v493
        %v495 = vand.u32 %v494, 4294901760
        %496 = vmatpush.msra.mxu0 %v495
        %v497 = vand.u32 %v229, 4294901760
        %v498 = vsub.f32 %v229, %v497
        %v499 = vand.u32 %v498, 4294901760
        %500 = vmatpush.msra.mxu0 %v499
        %v501 = vand.u32 %v228, 4294901760
        %v502 = vsub.f32 %v228, %v501
        %v503 = vand.u32 %v502, 4294901760
        %504 = vmatpush.msra.mxu0 %v503
        %v505 = vand.u32 %v227, 4294901760
        %v506 = vsub.f32 %v227, %v505
        %v507 = vand.u32 %v506, 4294901760
        %508 = vmatpush.msra.mxu0 %v507
        %v509 = vand.u32 %v226, 4294901760
        %v510 = vsub.f32 %v226, %v509
        %v511 = vand.u32 %v510, 4294901760
        %512 = vmatpush.msra.mxu0 %v511
        %v513 = vand.u32 %v225, 4294901760
        %v514 = vsub.f32 %v225, %v513
        %v515 = vand.u32 %v514, 4294901760
        %516 = vmatpush.msra.mxu0 %v515
        %v517 = vand.u32 %v224, 4294901760
        %v518 = vsub.f32 %v224, %v517
        %v519 = vand.u32 %v518, 4294901760
        %520 = vmatpush.msra.mxu0 %v519
        %v521 = vand.u32 %v223, 4294901760
        %v522 = vsub.f32 %v223, %v521
        %v523 = vand.u32 %v522, 4294901760
        %524 = vmatpush.msra.mxu0 %v523
        %v525 = vand.u32 %v222, 4294901760
        %v526 = vsub.f32 %v222, %v525
        %v527 = vand.u32 %v526, 4294901760
        %528 = vmatpush.msra.mxu0 %v527
        %v529 = vand.u32 %v221, 4294901760
        %v530 = vsub.f32 %v221, %v529
        %v531 = vand.u32 %v530, 4294901760
        %532 = vmatpush.msra.mxu0 %v531
        %v533 = vand.u32 %v220, 4294901760
        %v534 = vsub.f32 %v220, %v533
        %v535 = vand.u32 %v534, 4294901760
        %536 = vmatpush.msra.mxu0 %v535
        %v537 = vand.u32 %v219, 4294901760
        %538 = vmatmul.f32.gmra.mxu0 %v537
        %v539 = vpop.f32.mrf.mxu0
        %v540 = vadd.f32 %v471, %v539
        %541 = vdwg.mxu0
        %v542 = vand.u32 %v235, 4294901760
        %543 = vmatpush.msra.mxu0 %v542
        %v544 = vand.u32 %v234, 4294901760
        %545 = vmatpush.msra.mxu0 %v544
        %v546 = vand.u32 %v233, 4294901760
        %547 = vmatpush.msra.mxu0 %v546
        %v548 = vand.u32 %v232, 4294901760
        %549 = vmatpush.msra.mxu0 %v548
        %v550 = vand.u32 %v231, 4294901760
        %551 = vmatpush.msra.mxu0 %v550
        %v552 = vand.u32 %v230, 4294901760
        %553 = vmatpush.msra.mxu0 %v552
        %v554 = vand.u32 %v229, 4294901760
        %555 = vmatpush.msra.mxu0 %v554
        %v556 = vand.u32 %v228, 4294901760
        %557 = vmatpush.msra.mxu0 %v556
        %v558 = vand.u32 %v227, 4294901760
        %559 = vmatpush.msra.mxu0 %v558
        %v560 = vand.u32 %v226, 4294901760
        %561 = vmatpush.msra.mxu0 %v560
        %v562 = vand.u32 %v225, 4294901760
        %563 = vmatpush.msra.mxu0 %v562
        %v564 = vand.u32 %v224, 4294901760
        %565 = vmatpush.msra.mxu0 %v564
        %v566 = vand.u32 %v223, 4294901760
        %567 = vmatpush.msra.mxu0 %v566
        %v568 = vand.u32 %v222, 4294901760
        %569 = vmatpush.msra.mxu0 %v568
        %v570 = vand.u32 %v221, 4294901760
        %571 = vmatpush.msra.mxu0 %v570
        %v572 = vand.u32 %v220, 4294901760
        %573 = vmatpush.msra.mxu0 %v572
        %v574 = vand.u32 %v219, 4294901760
        %575 = vmatmul.f32.gmra.mxu0 %v574
        %v576 = vpop.f32.mrf.mxu0
        %v577 = vadd.f32 %v540, %v576
        %578 = vdwg.mxu0
        %579 = vadd.xlane.f32.xlu0 %v577
        %v580 = vpop.xlane.xlu0 %579
        %v581 = vmul.f32 %v580, 0.03125
        %v582 = vsub.f32 %v577, %v581
        %v583 = vmul.f32 %v582, %v582
        %584 = vadd.xlane.f32.xlu0 %v583
        %v585 = vpop.xlane.xlu0 %584
        %v586 = vmul.f32 %v581, %v581
        %v587 = vmul.f32 %v586, 96.0
        %v588 = vsub.f32 %v585, %v587
        %v589 = vmul.f32 %v588, 0.03125
        %v590 = vadd.f32 %v589, 1e-05
        %v591 = vrsqrt.pop %v590
        %v592 = vmul.f32 %v591, %v590
        %v593 = vmul.f32 %v592, %v591
        %v594 = vmul.f32 0.5, %v593
        %v595 = vsub.f32 1.5, %v594
        %v596 = vmul.f32 %v591, %v595
        %vm597 = vweird.f32 %v590
        %vm598 = vweird.f32 %v591
        %vm599 = vmor %vm597, %vm598
        %v600 = vsel %vm599, %v591, %v596
        %v601 = vmul.f32 %v582, %v600
        %v602 = vperm.slane %v236, 1
        %v603 = vmul.f32 %v602, %v601
        %v604 = vperm.slane %v236, 2
        %v605 = vadd.f32 %v603, %v604
        %v606 = vmax.f32 %v605, 0.0
        %607 = vst [vmem:[%s218] sm:$0xff] %v606
        %s608 = sand.u32 %s97, 1
        %s609 = scalar_lea.sflag [#allocation4], %s608
        %s610 = sand.u32 %s97, 1
        %s611 = smul.addr %s610, 8
        %s612 = scalar_lea.vmem [#allocation8], %s611
        // Predicated region
        $region45: #{tpu_custom_call.1} parent=31 // pred_check
          %p613 = pneg %p107
        $region46: #{tpu_custom_call.1} parent=31 // pred_check_branch
          %615 = sbr.rel (%p613) target = $region48
        $region47: #{tpu_custom_call.1} parent=31 // pred_region
          %617 = vsyncadd %s609, 0
          %s618 = smul.addr %s21, 8
          %s619 = scalar_lea.hbm %s3, %s618
          %s621 = sshll.u32 %s612, 4
          %s622 = int_to_ptr.vmem [resolvable:$true] %s621
          %s623 = sshll.u32 %s619, 4
          %s624 = int_to_ptr.hbm [resolvable:$true] %s623
          %626 = dma.vmem_to_hbm [thread:$0]  %s622, 128, %s624, %s609
        $region48: #{tpu_custom_call.1} parent=31 // pred_fallthru
          _
      $region32: #{tpu_custom_call.1} parent=5 // pred_fallthru
        _
      %p627 = scmp.le.s32.totalorder 2, %s16
      // Predicated region
      $region49: #{tpu_custom_call.1} parent=5 // pred_check
        %p628 = pneg %p627
      $region50: #{tpu_custom_call.1} parent=5 // pred_check_branch
        %630 = sbr.rel (%p628) target = $region52
      $region51: #{tpu_custom_call.1} parent=5 // pred_region
        %s631 = ssub.s32 %s16, 2
        // Predicated region
        $region53: #{tpu_custom_call.1} parent=51 // pred_check
          %p632 = pneg %p113
        $region54: #{tpu_custom_call.1} parent=51 // pred_check_branch
          %634 = sbr.rel (%p632) target = $region56
        $region55: #{tpu_custom_call.1} parent=51 // pred_region
          %s635 = sand.u32 %s98, 1
          %s636 = scalar_lea.sflag [#allocation4], %s635
          %s637 = sand.u32 %s98, 1
          %s638 = smul.addr %s637, 8
          %s639 = scalar_lea.vmem [#allocation8], %s638
          %641 = dma.done %s636, 128
        $region56: #{tpu_custom_call.1} parent=51 // pred_fallthru
          _
      $region52: #{tpu_custom_call.1} parent=5 // pred_fallthru
        _
    $region6: #{tpu_custom_call.1} parent=1 // loop_footer
      %s20 = sadd.s32 1, %s16
    $region7: #{tpu_custom_call.1} parent=1 // loop_footer_branch
      %15 = sbr.rel target = $region3
    $region8: #{tpu_custom_call.1} parent=1 // loop_exit
      _
    %642 = vsyncpa [#allocation3], 1
    %s643 = scalar_lea.sflag [#allocation3], 1
    %644 = vsyncpa %s643, 1
    %645 = vsyncpa [#allocation6], 1
    %646 = vsyncpa [#allocation4], 1
    %s647 = scalar_lea.sflag [#allocation4], 1
    %648 = vsyncpa %s647, 1

// kernel: tpu_custom_call.1
$region0: #{tpu_custom_call.1}
  #allocation0 [shape = 'u32[]', space=smem, size = 0x4, offset = 0x4, fixed_abs, tag = 'smem constant byte address 0x4 - core index']
  #allocation1 [shape = 'u32[72,128]{1,0:T(1,128)}', space=vmem, size = 0x9000, scoped, tag = 'internal scratch']
  %s0 = inlined_call_operand.hbm [shape: f32[16,128], index: 0, kind: input, shape index: {}]
  %s1 = inlined_call_operand.hbm [shape: f32[128,128], index: 1, kind: input, shape index: {}]
  %s2 = inlined_call_operand.hbm [shape: f32[3,128], index: 2, kind: input, shape index: {}]
  %s3 = inlined_call_operand.hbm [shape: f32[16,128], index: 3, kind: output, shape index: {}]
  %s4 = sld [smem:[#allocation0]]
  $region57: #{tpu_custom_call.1} parent=0
    _
  %s6 = ssub.s32 1, %s4
  %s7 = scalar_select 0, %s6, %s4
  $region1: #{tpu_custom_call.1} parent=0
    #allocation2 [shape = 'u8[8192]{0}', space=vmem, size = 0x2000, scoped, tag = 'input window, operand 0']
    #allocation3 [shape = 's32[2]{0}', space=sflag, size = 0x8, scoped, tag = 'scoped memory for tpu_custom_call.1']
    #allocation4 [shape = 's32[2]{0}', space=sflag, size = 0x8, scoped, tag = 'scoped memory for tpu_custom_call.1']
    #allocation5 [shape = 'u8[65536]{0}', space=vmem, size = 0x10000, scoped, tag = 'input window, operand 1, single buffered']
    #allocation6 [shape = 's32[1]{0}', space=sflag, size = 0x4, scoped, tag = 'scoped memory for tpu_custom_call.1']
    #allocation7 [shape = 'u8[2048]{0}', space=vmem, size = 0x800, scoped, tag = 'input window, operand 2, single buffered']
    #allocation8 [shape = 'u8[8192]{0}', space=vmem, size = 0x2000, scoped, tag = 'output window, operand 0']
    %8 = vsyncpa [#allocation3], 0
    %s9 = scalar_lea.sflag [#allocation3], 1
    %10 = vsyncpa %s9, 0
    %11 = vsyncpa [#allocation6], 0
    %12 = vsyncpa [#allocation4], 0
    %s13 = scalar_lea.sflag [#allocation4], 1
    %14 = vsyncpa %s13, 0
    loop: start=0, step=1, limit=4
    $region2: #{tpu_custom_call.1} parent=1 // loop_pre_header
      _
    $region3: #{tpu_custom_call.1} parent=1 // loop_header
      %s16 = sphi 0, %s20
      %p17 = scmp.ge.s32.totalorder %s16, 4
      %s26 = sphi 0, %s28
      %s29 = sphi 0, %s26
      %s30 = sphi 0, %s29
      %s46 = sphi 0, %s30
      %s50 = sphi 0, %s50
      %s52 = sphi 0, %s50
      %s53 = sphi 0, %s52
      %s67 = sphi 0, %s53
      %s71 = sphi 0, %s71
      %s73 = sphi 0, %s71
      %s74 = sphi 0, %s73
      %s88 = sphi 0, %s74
      %s94 = sphi 0, %s96
      %s97 = sphi 0, %s94
      %s98 = sphi 0, %s97
      %s114 = sphi 0, %s98
    $region4: #{tpu_custom_call.1} parent=1 // loop_header_branch
      %19 = sbr.rel (%p17) target = $region8
    $region5: #{tpu_custom_call.1} parent=1 // loop_body
      %s21 = ssub.s32 %s16, 1
      %s22 = ssub.s32 %s16, 2
      %s23 = sadd.s32 %s16, 1
      %s24 = ssub.s32 %s16, %s23
      %p25 = scmp.eq.s32.totalorder %s24, 0
      %s27 = sadd.s32 %s26, 1
      %s28 = scalar_select %p25, %s26, %s27
      %p31 = pneg %p25
      %p32 = scmp.eq.s32.totalorder %s16, 1
      %p33 = por %p31, %p32
      %p34 = scmp.ne.s32.totalorder %s26, %s29
      %p35 = scmp.eq.s32.totalorder %s16, 0
      %p36 = por %p34, %p35
      %p37 = scmp.ne.s32.totalorder %s26, %s29
      %p38 = scmp.eq.s32.totalorder %s21, 1
      %p39 = por %p37, %p38
      %p40 = scmp.ne.s32.totalorder %s29, %s30
      %p41 = scmp.eq.s32.totalorder %s21, 0
      %p42 = por %p40, %p41
      %p43 = scmp.ne.s32.totalorder %s29, %s30
      %p44 = scmp.eq.s32.totalorder %s22, 1
      %p45 = por %p43, %p44
      %p47 = scmp.ne.s32.totalorder %s30, %s46
      %p48 = scmp.eq.s32.totalorder %s22, 0
      %p49 = por %p47, %p48
      %s51 = sadd.s32 %s50, 1
      %p54 = scmp.eq.s32.totalorder %s16, 1
      %p55 = scmp.ne.s32.totalorder %s50, %s52
      %p56 = scmp.eq.s32.totalorder %s16, 0
      %p57 = por %p55, %p56
      %p58 = scmp.ne.s32.totalorder %s50, %s52
      %p59 = scmp.eq.s32.totalorder %s21, 1
      %p60 = por %p58, %p59
      %p61 = scmp.ne.s32.totalorder %s52, %s53
      %p62 = scmp.eq.s32.totalorder %s21, 0
      %p63 = por %p61, %p62
      %p64 = scmp.ne.s32.totalorder %s52, %s53
      %p65 = scmp.eq.s32.totalorder %s22, 1
      %p66 = por %p64, %p65
      %p68 = scmp.ne.s32.totalorder %s53, %s67
      %p69 = scmp.eq.s32.totalorder %s22, 0
      %p70 = por %p68, %p69
      %s72 = sadd.s32 %s71, 1
      %p75 = scmp.eq.s32.totalorder %s16, 1
      %p76 = scmp.ne.s32.totalorder %s71, %s73
      %p77 = scmp.eq.s32.totalorder %s16, 0
      %p78 = por %p76, %p77
      %p79 = scmp.ne.s32.totalorder %s71, %s73
      %p80 = scmp.eq.s32.totalorder %s21, 1
      %p81 = por %p79, %p80
      %p82 = scmp.ne.s32.totalorder %s73, %s74
      %p83 = scmp.eq.s32.totalorder %s21, 0
      %p84 = por %p82, %p83
      %p85 = scmp.ne.s32.totalorder %s73, %s74
      %p86 = scmp.eq.s32.totalorder %s22, 1
      %p87 = por %p85, %p86
      %p89 = scmp.ne.s32.totalorder %s74, %s88
      %p90 = scmp.eq.s32.totalorder %s22, 0
      %p91 = por %p89, %p90
      %s92 = ssub.s32 %s16, %s23
      %p93 = scmp.eq.s32.totalorder %s92, 0
      %s95 = sadd.s32 %s94, 1
      %s96 = scalar_select %p93, %s94, %s95
      %p99 = pneg %p93
      %p100 = scmp.eq.s32.totalorder %s16, 1
      %p101 = por %p99, %p100
      %p102 = scmp.ne.s32.totalorder %s94, %s97
      %p103 = scmp.eq.s32.totalorder %s16, 0
      %p104 = por %p102, %p103
      %p105 = scmp.ne.s32.totalorder %s94, %s97
      %p106 = scmp.eq.s32.totalorder %s21, 1
      %p107 = por %p105, %p106
      %p108 = scmp.ne.s32.totalorder %s97, %s98
      %p109 = scmp.eq.s32.totalorder %s21, 0
      %p110 = por %p108, %p109
      %p111 = scmp.ne.s32.totalorder %s97, %s98
      %p112 = scmp.eq.s32.totalorder %s22, 1
      %p113 = por %p111, %p112
      %p115 = scmp.ne.s32.totalorder %s98, %s114
      %p116 = scmp.eq.s32.totalorder %s22, 0
      %p117 = por %p115, %p116
      %p118 = scmp.le.s32.totalorder 1, %s16
      %p119 = scmp.lt.s32.totalorder %s16, 3
      %p120 = pnand %p118, %p119
      %p121 = pneg %p120
      // Predicated region
      $region9: #{tpu_custom_call.1} parent=5 // pred_check
        _
      $region10: #{tpu_custom_call.1} parent=5 // pred_check_branch
        %123 = sbr.rel (%p120) target = $region12
      $region11: #{tpu_custom_call.1} parent=5 // pred_region
        %s124 = ssub.s32 %s16, 1
        // Predicated region
        $region13: #{tpu_custom_call.1} parent=11 // pred_check
          %p125 = pneg %p63
        $region14: #{tpu_custom_call.1} parent=11 // pred_check_branch
          %127 = sbr.rel (%p125) target = $region16
        $region15: #{tpu_custom_call.1} parent=11 // pred_region
          %129 = vsyncadd [#allocation6], 0
          %s130 = sshll.u32 %s1, 4
          %s131 = int_to_ptr.hbm [resolvable:$true] %s130
          %s132 = sshll.u32 [#allocation5], 4
          %s133 = int_to_ptr.vmem [resolvable:$true] %s132
          %138 = dma.hbm_to_vmem [thread:$0]  %s131, 2048, %s133, [#allocation6], 128, 128, 8
        $region16: #{tpu_custom_call.1} parent=11 // pred_fallthru
          _
        // Predicated region
        $region17: #{tpu_custom_call.1} parent=11 // pred_check
          %p139 = pneg %p84
        $region18: #{tpu_custom_call.1} parent=11 // pred_check_branch
          %141 = sbr.rel (%p139) target = $region20
        $region19: #{tpu_custom_call.1} parent=11 // pred_region
          %143 = vsyncadd [#allocation6], 0
          %s145 = sshll.u32 %s2, 4
          %s146 = int_to_ptr.hbm [resolvable:$true] %s145
          %s147 = sshll.u32 [#allocation7], 4
          %s148 = int_to_ptr.vmem [resolvable:$true] %s147
          %150 = dma.hbm_to_vmem [thread:$0]  %s146, 64, %s148, [#allocation6]
        $region20: #{tpu_custom_call.1} parent=11 // pred_fallthru
          _
      $region12: #{tpu_custom_call.1} parent=5 // pred_fallthru
        _
      %p151 = scmp.lt.s32.totalorder %s16, 2
      // Predicated region
      $region21: #{tpu_custom_call.1} parent=5 // pred_check
        %p152 = pneg %p151
      $region22: #{tpu_custom_call.1} parent=5 // pred_check_branch
        %154 = sbr.rel (%p152) target = $region24
      $region23: #{tpu_custom_call.1} parent=5 // pred_region
        // Predicated region
        $region25: #{tpu_custom_call.1} parent=23 // pred_check
          %p155 = pneg %p36
        $region26: #{tpu_custom_call.1} parent=23 // pred_check_branch
          %157 = sbr.rel (%p155) target = $region28
        $region27: #{tpu_custom_call.1} parent=23 // pred_region
          %s158 = sand.u32 %s26, 1
          %s159 = scalar_lea.sflag [#allocation3], %s158
          %s160 = sand.u32 %s26, 1
          %s161 = smul.addr %s160, 8
          %s162 = scalar_lea.vmem [#allocation2], %s161
          %164 = vsyncadd %s159, 0
          %s165 = smul.addr %s16, 8
          %s166 = scalar_lea.hbm %s0, %s165
          %s168 = sshll.u32 %s166, 4
          %s169 = int_to_ptr.hbm [resolvable:$true] %s168
          %s170 = sshll.u32 %s162, 4
          %s171 = int_to_ptr.vmem [resolvable:$true] %s170
          %173 = dma.hbm_to_vmem [thread:$0]  %s169, 128, %s171, %s159
        $region28: #{tpu_custom_call.1} parent=23 // pred_fallthru
          _
      $region24: #{tpu_custom_call.1} parent=5 // pred_fallthru
        _
      %p174 = scmp.le.s32.totalorder 1, %s16
      %p175 = scmp.lt.s32.totalorder %s16, 3
      %p176 = pnand %p174, %p175
      %p177 = pneg %p176
      // Predicated region
      $region29: #{tpu_custom_call.1} parent=5 // pred_check
        _
      $region30: #{tpu_custom_call.1} parent=5 // pred_check_branch
        %179 = sbr.rel (%p176) target = $region32
      $region31: #{tpu_custom_call.1} parent=5 // pred_region
        %s180 = ssub.s32 %s16, 1
        %s181 = sand.u32 %s29, 1
        %s182 = scalar_lea.sflag [#allocation3], %s181
        %s183 = sand.u32 %s29, 1
        %s184 = smul.addr %s183, 8
        %s185 = scalar_lea.vmem [#allocation2], %s184
        // Predicated region
        $region33: #{tpu_custom_call.1} parent=31 // pred_check
          %p186 = pneg %p42
        $region34: #{tpu_custom_call.1} parent=31 // pred_check_branch
          %188 = sbr.rel (%p186) target = $region36
        $region35: #{tpu_custom_call.1} parent=31 // pred_region
          %190 = dma.done %s182, 128
        $region36: #{tpu_custom_call.1} parent=31 // pred_fallthru
          _
        // Predicated region
        $region37: #{tpu_custom_call.1} parent=31 // pred_check
          %p191 = pneg %p63
        $region38: #{tpu_custom_call.1} parent=31 // pred_check_branch
          %193 = sbr.rel (%p191) target = $region40
        $region39: #{tpu_custom_call.1} parent=31 // pred_region
          %195 = dma.done [#allocation6], 2048
        $region40: #{tpu_custom_call.1} parent=31 // pred_fallthru
          _
        // Predicated region
        $region41: #{tpu_custom_call.1} parent=31 // pred_check
          %p196 = pneg %p84
        $region42: #{tpu_custom_call.1} parent=31 // pred_check_branch
          %198 = sbr.rel (%p196) target = $region44
        $region43: #{tpu_custom_call.1} parent=31 // pred_region
          %200 = dma.done [#allocation6], 64
        $region44: #{tpu_custom_call.1} parent=31 // pred_fallthru
          _
        %s201 = sand.u32 %s29, 1
        %s202 = scalar_lea.sflag [#allocation3], %s201
        %s203 = sand.u32 %s29, 1
        %s204 = smul.addr %s203, 8
        %s205 = scalar_lea.vmem [#allocation2], %s204
        %p206 = pneg %p42
        %p207 = pneg %p39
        %p208 = pneg %p63
        %p209 = pneg %p60
        %p210 = pneg %p84
        %p211 = pneg %p81
        %p212 = pneg %p110
        %p213 = pneg %p107
        %s214 = sand.u32 %s97, 1
        %s215 = scalar_lea.sflag [#allocation4], %s214
        %s216 = sand.u32 %s97, 1
        %s217 = smul.addr %s216, 8
        %s218 = scalar_lea.vmem [#allocation8], %s217
        %v219 = vld [vmem:[%s185] sm:$0xff]
        %v220 = vld [vmem:[#allocation5] sm:$0xff]
        %v221 = vld [vmem:[#allocation5 + $0x8] sm:$0xff]
        %v222 = vld [vmem:[#allocation5 + $0x10] sm:$0xff]
        %v223 = vld [vmem:[#allocation5 + $0x18] sm:$0xff]
        %v224 = vld [vmem:[#allocation5 + $0x20] sm:$0xff]
        %v225 = vld [vmem:[#allocation5 + $0x28] sm:$0xff]
        %v226 = vld [vmem:[#allocation5 + $0x30] sm:$0xff]
        %v227 = vld [vmem:[#allocation5 + $0x38] sm:$0xff]
        %v228 = vld [vmem:[#allocation5 + $0x40] sm:$0xff]
        %v229 = vld [vmem:[#allocation5 + $0x48] sm:$0xff]
        %v230 = vld [vmem:[#allocation5 + $0x50] sm:$0xff]
        %v231 = vld [vmem:[#allocation5 + $0x58] sm:$0xff]
        %v232 = vld [vmem:[#allocation5 + $0x60] sm:$0xff]
        %v233 = vld [vmem:[#allocation5 + $0x68] sm:$0xff]
        %v234 = vld [vmem:[#allocation5 + $0x70] sm:$0xff]
        %v235 = vld [vmem:[#allocation5 + $0x78] sm:$0xff]
        %v236 = vld [vmem:[#allocation7] sm:$0x7]
        %v237 = vperm.slane %v236, 0
        %v238 = vand.u32 %v235, 4294901760
        %239 = vmatpush.msra.mxu0 %v238
        %v240 = vand.u32 %v234, 4294901760
        %241 = vmatpush.msra.mxu0 %v240
        %v242 = vand.u32 %v233, 4294901760
        %243 = vmatpush.msra.mxu0 %v242
        %v244 = vand.u32 %v232, 4294901760
        %245 = vmatpush.msra.mxu0 %v244
        %v246 = vand.u32 %v231, 4294901760
        %247 = vmatpush.msra.mxu0 %v246
        %v248 = vand.u32 %v230, 4294901760
        %249 = vmatpush.msra.mxu0 %v248
        %v250 = vand.u32 %v229, 4294901760
        %251 = vmatpush.msra.mxu0 %v250
        %v252 = vand.u32 %v228, 4294901760
        %253 = vmatpush.msra.mxu0 %v252
        %v254 = vand.u32 %v227, 4294901760
        %255 = vmatpush.msra.mxu0 %v254
        %v256 = vand.u32 %v226, 4294901760
        %257 = vmatpush.msra.mxu0 %v256
        %v258 = vand.u32 %v225, 4294901760
        %259 = vmatpush.msra.mxu0 %v258
        %v260 = vand.u32 %v224, 4294901760
        %261 = vmatpush.msra.mxu0 %v260
        %v262 = vand.u32 %v223, 4294901760
        %263 = vmatpush.msra.mxu0 %v262
        %v264 = vand.u32 %v222, 4294901760
        %265 = vmatpush.msra.mxu0 %v264
        %v266 = vand.u32 %v221, 4294901760
        %267 = vmatpush.msra.mxu0 %v266
        %v268 = vand.u32 %v220, 4294901760
        %269 = vmatpush.msra.mxu0 %v268
        %v270 = vand.u32 %v219, 4294901760
        %v271 = vsub.f32 %v219, %v270
        %v272 = vand.u32 %v271, 4294901760
        %v273 = vsub.f32 %v271, %v272
        %v274 = vand.u32 %v273, 4294901760
        %275 = vmatmul.f32.gmra.mxu0 %v274
        %v276 = vpop.f32.mrf.mxu0
        %v277 = vadd.f32 %v237, %v276
        %278 = vdwg.mxu0
        %v279 = vand.u32 %v235, 4294901760
        %v280 = vsub.f32 %v235, %v279
        %v281 = vand.u32 %v280, 4294901760
        %v282 = vsub.f32 %v280, %v281
        %v283 = vand.u32 %v282, 4294901760
        %284 = vmatpush.msra.mxu0 %v283
        %v285 = vand.u32 %v234, 4294901760
        %v286 = vsub.f32 %v234, %v285
        %v287 = vand.u32 %v286, 4294901760
        %v288 = vsub.f32 %v286, %v287
        %v289 = vand.u32 %v288, 4294901760
        %290 = vmatpush.msra.mxu0 %v289
        %v291 = vand.u32 %v233, 4294901760
        %v292 = vsub.f32 %v233, %v291
        %v293 = vand.u32 %v292, 4294901760
        %v294 = vsub.f32 %v292, %v293
        %v295 = vand.u32 %v294, 4294901760
        %296 = vmatpush.msra.mxu0 %v295
        %v297 = vand.u32 %v232, 4294901760
        %v298 = vsub.f32 %v232, %v297
        %v299 = vand.u32 %v298, 4294901760
        %v300 = vsub.f32 %v298, %v299
        %v301 = vand.u32 %v300, 4294901760
        %302 = vmatpush.msra.mxu0 %v301
        %v303 = vand.u32 %v231, 4294901760
        %v304 = vsub.f32 %v231, %v303
        %v305 = vand.u32 %v304, 4294901760
        %v306 = vsub.f32 %v304, %v305
        %v307 = vand.u32 %v306, 4294901760
        %308 = vmatpush.msra.mxu0 %v307
        %v309 = vand.u32 %v230, 4294901760
        %v310 = vsub.f32 %v230, %v309
        %v311 = vand.u32 %v310, 4294901760
        %v312 = vsub.f32 %v310, %v311
        %v313 = vand.u32 %v312, 4294901760
        %314 = vmatpush.msra.mxu0 %v313
        %v315 = vand.u32 %v229, 4294901760
        %v316 = vsub.f32 %v229, %v315
        %v317 = vand.u32 %v316, 4294901760
        %v318 = vsub.f32 %v316, %v317
        %v319 = vand.u32 %v318, 4294901760
        %320 = vmatpush.msra.mxu0 %v319
        %v321 = vand.u32 %v228, 4294901760
        %v322 = vsub.f32 %v228, %v321
        %v323 = vand.u32 %v322, 4294901760
        %v324 = vsub.f32 %v322, %v323
        %v325 = vand.u32 %v324, 4294901760
        %326 = vmatpush.msra.mxu0 %v325
        %v327 = vand.u32 %v227, 4294901760
        %v328 = vsub.f32 %v227, %v327
        %v329 = vand.u32 %v328, 4294901760
        %v330 = vsub.f32 %v328, %v329
        %v331 = vand.u32 %v330, 4294901760
        %332 = vmatpush.msra.mxu0 %v331
        %v333 = vand.u32 %v226, 4294901760
        %v334 = vsub.f32 %v226, %v333
        %v335 = vand.u32 %v334, 4294901760
        %v336 = vsub.f32 %v334, %v335
        %v337 = vand.u32 %v336, 4294901760
        %338 = vmatpush.msra.mxu0 %v337
        %v339 = vand.u32 %v225, 4294901760
        %v340 = vsub.f32 %v225, %v339
        %v341 = vand.u32 %v340, 4294901760
        %v342 = vsub.f32 %v340, %v341
        %v343 = vand.u32 %v342, 4294901760
        %344 = vmatpush.msra.mxu0 %v343
        %v345 = vand.u32 %v224, 4294901760
        %v346 = vsub.f32 %v224, %v345
        %v347 = vand.u32 %v346, 4294901760
        %v348 = vsub.f32 %v346, %v347
        %v349 = vand.u32 %v348, 4294901760
        %350 = vmatpush.msra.mxu0 %v349
        %v351 = vand.u32 %v223, 4294901760
        %v352 = vsub.f32 %v223, %v351
        %v353 = vand.u32 %v352, 4294901760
        %v354 = vsub.f32 %v352, %v353
        %v355 = vand.u32 %v354, 4294901760
        %356 = vmatpush.msra.mxu0 %v355
        %v357 = vand.u32 %v222, 4294901760
        %v358 = vsub.f32 %v222, %v357
        %v359 = vand.u32 %v358, 4294901760
        %v360 = vsub.f32 %v358, %v359
        %v361 = vand.u32 %v360, 4294901760
        %362 = vmatpush.msra.mxu0 %v361
        %v363 = vand.u32 %v221, 4294901760
        %v364 = vsub.f32 %v221, %v363
        %v365 = vand.u32 %v364, 4294901760
        %v366 = vsub.f32 %v364, %v365
        %v367 = vand.u32 %v366, 4294901760
        %368 = vmatpush.msra.mxu0 %v367
        %v369 = vand.u32 %v220, 4294901760
        %v370 = vsub.f32 %v220, %v369
        %v371 = vand.u32 %v370, 4294901760
        %v372 = vsub.f32 %v370, %v371
        %v373 = vand.u32 %v372, 4294901760
        %374 = vmatpush.msra.mxu0 %v373
        %v375 = vand.u32 %v219, 4294901760
        %376 = vmatmul.f32.gmra.mxu0 %v375
        %v377 = vpop.f32.mrf.mxu0
        %v378 = vadd.f32 %v277, %v377
        %379 = vdwg.mxu0
        %v380 = vand.u32 %v235, 4294901760
        %v381 = vsub.f32 %v235, %v380
        %382 = vmatpush.msra.mxu0 %v381
        %v383 = vand.u32 %v234, 4294901760
        %v384 = vsub.f32 %v234, %v383
        %385 = vmatpush.msra.mxu0 %v384
        %v386 = vand.u32 %v233, 4294901760
        %v387 = vsub.f32 %v233, %v386
        %388 = vmatpush.msra.mxu0 %v387
        %v389 = vand.u32 %v232, 4294901760
        %v390 = vsub.f32 %v232, %v389
        %391 = vmatpush.msra.mxu0 %v390
        %v392 = vand.u32 %v231, 4294901760
        %v393 = vsub.f32 %v231, %v392
        %394 = vmatpush.msra.mxu0 %v393
        %v395 = vand.u32 %v230, 4294901760
        %v396 = vsub.f32 %v230, %v395
        %397 = vmatpush.msra.mxu0 %v396
        %v398 = vand.u32 %v229, 4294901760
        %v399 = vsub.f32 %v229, %v398
        %400 = vmatpush.msra.mxu0 %v399
        %v401 = vand.u32 %v228, 4294901760
        %v402 = vsub.f32 %v228, %v401
        %403 = vmatpush.msra.mxu0 %v402
        %v404 = vand.u32 %v227, 4294901760
        %v405 = vsub.f32 %v227, %v404
        %406 = vmatpush.msra.mxu0 %v405
        %v407 = vand.u32 %v226, 4294901760
        %v408 = vsub.f32 %v226, %v407
        %409 = vmatpush.msra.mxu0 %v408
        %v410 = vand.u32 %v225, 4294901760
        %v411 = vsub.f32 %v225, %v410
        %412 = vmatpush.msra.mxu0 %v411
        %v413 = vand.u32 %v224, 4294901760
        %v414 = vsub.f32 %v224, %v413
        %415 = vmatpush.msra.mxu0 %v414
        %v416 = vand.u32 %v223, 4294901760
        %v417 = vsub.f32 %v223, %v416
        %418 = vmatpush.msra.mxu0 %v417
        %v419 = vand.u32 %v222, 4294901760
        %v420 = vsub.f32 %v222, %v419
        %421 = vmatpush.msra.mxu0 %v420
        %v422 = vand.u32 %v221, 4294901760
        %v423 = vsub.f32 %v221, %v422
        %424 = vmatpush.msra.mxu0 %v423
        %v425 = vand.u32 %v220, 4294901760
        %v426 = vsub.f32 %v220, %v425
        %427 = vmatpush.msra.mxu0 %v426
        %v428 = vand.u32 %v219, 4294901760
        %v429 = vsub.f32 %v219, %v428
        %430 = vmatmul.f32.gmra.mxu0 %v429
        %v431 = vpop.f32.mrf.mxu0
        %v432 = vadd.f32 %v378, %v431
        %433 = vdwg.mxu0
        %v434 = vand.u32 %v235, 4294901760
        %435 = vmatpush.msra.mxu0 %v434
        %v436 = vand.u32 %v234, 4294901760
        %437 = vmatpush.msra.mxu0 %v436
        %v438 = vand.u32 %v233, 4294901760
        %439 = vmatpush.msra.mxu0 %v438
        %v440 = vand.u32 %v232, 4294901760
        %441 = vmatpush.msra.mxu0 %v440
        %v442 = vand.u32 %v231, 4294901760
        %443 = vmatpush.msra.mxu0 %v442
        %v444 = vand.u32 %v230, 4294901760
        %445 = vmatpush.msra.mxu0 %v444
        %v446 = vand.u32 %v229, 4294901760
        %447 = vmatpush.msra.mxu0 %v446
        %v448 = vand.u32 %v228, 4294901760
        %449 = vmatpush.msra.mxu0 %v448
        %v450 = vand.u32 %v227, 4294901760
        %451 = vmatpush.msra.mxu0 %v450
        %v452 = vand.u32 %v226, 4294901760
        %453 = vmatpush.msra.mxu0 %v452
        %v454 = vand.u32 %v225, 4294901760
        %455 = vmatpush.msra.mxu0 %v454
        %v456 = vand.u32 %v224, 4294901760
        %457 = vmatpush.msra.mxu0 %v456
        %v458 = vand.u32 %v223, 4294901760
        %459 = vmatpush.msra.mxu0 %v458
        %v460 = vand.u32 %v222, 4294901760
        %461 = vmatpush.msra.mxu0 %v460
        %v462 = vand.u32 %v221, 4294901760
        %463 = vmatpush.msra.mxu0 %v462
        %v464 = vand.u32 %v220, 4294901760
        %465 = vmatpush.msra.mxu0 %v464
        %v466 = vand.u32 %v219, 4294901760
        %v467 = vsub.f32 %v219, %v466
        %v468 = vand.u32 %v467, 4294901760
        %469 = vmatmul.f32.gmra.mxu0 %v468
        %v470 = vpop.f32.mrf.mxu0
        %v471 = vadd.f32 %v432, %v470
        %472 = vdwg.mxu0
        %v473 = vand.u32 %v235, 4294901760
        %v474 = vsub.f32 %v235, %v473
        %v475 = vand.u32 %v474, 4294901760
        %476 = vmatpush.msra.mxu0 %v475
        %v477 = vand.u32 %v234, 4294901760
        %v478 = vsub.f32 %v234, %v477
        %v479 = vand.u32 %v478, 4294901760
        %480 = vmatpush.msra.mxu0 %v479
        %v481 = vand.u32 %v233, 4294901760
        %v482 = vsub.f32 %v233, %v481
        %v483 = vand.u32 %v482, 4294901760
        %484 = vmatpush.msra.mxu0 %v483
        %v485 = vand.u32 %v232, 4294901760
        %v486 = vsub.f32 %v232, %v485
        %v487 = vand.u32 %v486, 4294901760
        %488 = vmatpush.msra.mxu0 %v487
        %v489 = vand.u32 %v231, 4294901760
        %v490 = vsub.f32 %v231, %v489
        %v491 = vand.u32 %v490, 4294901760
        %492 = vmatpush.msra.mxu0 %v491
        %v493 = vand.u32 %v230, 4294901760
        %v494 = vsub.f32 %v230, %v493
        %v495 = vand.u32 %v494, 4294901760
        %496 = vmatpush.msra.mxu0 %v495
        %v497 = vand.u32 %v229, 4294901760
        %v498 = vsub.f32 %v229, %v497
        %v499 = vand.u32 %v498, 4294901760
        %500 = vmatpush.msra.mxu0 %v499
        %v501 = vand.u32 %v228, 4294901760
        %v502 = vsub.f32 %v228, %v501
        %v503 = vand.u32 %v502, 4294901760
        %504 = vmatpush.msra.mxu0 %v503
        %v505 = vand.u32 %v227, 4294901760
        %v506 = vsub.f32 %v227, %v505
        %v507 = vand.u32 %v506, 4294901760
        %508 = vmatpush.msra.mxu0 %v507
        %v509 = vand.u32 %v226, 4294901760
        %v510 = vsub.f32 %v226, %v509
        %v511 = vand.u32 %v510, 4294901760
        %512 = vmatpush.msra.mxu0 %v511
        %v513 = vand.u32 %v225, 4294901760
        %v514 = vsub.f32 %v225, %v513
        %v515 = vand.u32 %v514, 4294901760
        %516 = vmatpush.msra.mxu0 %v515
        %v517 = vand.u32 %v224, 4294901760
        %v518 = vsub.f32 %v224, %v517
        %v519 = vand.u32 %v518, 4294901760
        %520 = vmatpush.msra.mxu0 %v519
        %v521 = vand.u32 %v223, 4294901760
        %v522 = vsub.f32 %v223, %v521
        %v523 = vand.u32 %v522, 4294901760
        %524 = vmatpush.msra.mxu0 %v523
        %v525 = vand.u32 %v222, 4294901760
        %v526 = vsub.f32 %v222, %v525
        %v527 = vand.u32 %v526, 4294901760
        %528 = vmatpush.msra.mxu0 %v527
        %v529 = vand.u32 %v221, 4294901760
        %v530 = vsub.f32 %v221, %v529
        %v531 = vand.u32 %v530, 4294901760
        %532 = vmatpush.msra.mxu0 %v531
        %v533 = vand.u32 %v220, 4294901760
        %v534 = vsub.f32 %v220, %v533
        %v535 = vand.u32 %v534, 4294901760
        %536 = vmatpush.msra.mxu0 %v535
        %v537 = vand.u32 %v219, 4294901760
        %538 = vmatmul.f32.gmra.mxu0 %v537
        %v539 = vpop.f32.mrf.mxu0
        %v540 = vadd.f32 %v471, %v539
        %541 = vdwg.mxu0
        %v542 = vand.u32 %v235, 4294901760
        %543 = vmatpush.msra.mxu0 %v542
        %v544 = vand.u32 %v234, 4294901760
        %545 = vmatpush.msra.mxu0 %v544
        %v546 = vand.u32 %v233, 4294901760
        %547 = vmatpush.msra.mxu0 %v546
        %v548 = vand.u32 %v232, 4294901760
        %549 = vmatpush.msra.mxu0 %v548
        %v550 = vand.u32 %v231, 4294901760
        %551 = vmatpush.msra.mxu0 %v550
        %v552 = vand.u32 %v230, 4294901760
        %553 = vmatpush.msra.mxu0 %v552
        %v554 = vand.u32 %v229, 4294901760
        %555 = vmatpush.msra.mxu0 %v554
        %v556 = vand.u32 %v228, 4294901760
        %557 = vmatpush.msra.mxu0 %v556
        %v558 = vand.u32 %v227, 4294901760
        %559 = vmatpush.msra.mxu0 %v558
        %v560 = vand.u32 %v226, 4294901760
        %561 = vmatpush.msra.mxu0 %v560
        %v562 = vand.u32 %v225, 4294901760
        %563 = vmatpush.msra.mxu0 %v562
        %v564 = vand.u32 %v224, 4294901760
        %565 = vmatpush.msra.mxu0 %v564
        %v566 = vand.u32 %v223, 4294901760
        %567 = vmatpush.msra.mxu0 %v566
        %v568 = vand.u32 %v222, 4294901760
        %569 = vmatpush.msra.mxu0 %v568
        %v570 = vand.u32 %v221, 4294901760
        %571 = vmatpush.msra.mxu0 %v570
        %v572 = vand.u32 %v220, 4294901760
        %573 = vmatpush.msra.mxu0 %v572
        %v574 = vand.u32 %v219, 4294901760
        %575 = vmatmul.f32.gmra.mxu0 %v574
        %v576 = vpop.f32.mrf.mxu0
        %v577 = vadd.f32 %v540, %v576
        %578 = vdwg.mxu0
        %579 = vadd.xlane.f32.xlu0 %v577
        %v580 = vpop.xlane.xlu0 %579
        %v581 = vmul.f32 %v580, 0.03125
        %v582 = vsub.f32 %v577, %v581
        %v583 = vmul.f32 %v582, %v582
        %584 = vadd.xlane.f32.xlu0 %v583
        %v585 = vpop.xlane.xlu0 %584
        %v586 = vmul.f32 %v581, %v581
        %v587 = vmul.f32 %v586, 96.0
        %v588 = vsub.f32 %v585, %v587
        %v589 = vmul.f32 %v588, 0.03125
        %v590 = vadd.f32 %v589, 1e-05
        %v591 = vrsqrt.pop %v590
        %v592 = vmul.f32 %v591, %v590
        %v593 = vmul.f32 %v592, %v591
        %v594 = vmul.f32 0.5, %v593
        %v595 = vsub.f32 1.5, %v594
        %v596 = vmul.f32 %v591, %v595
        %vm597 = vweird.f32 %v590
        %vm598 = vweird.f32 %v591
        %vm599 = vmor %vm597, %vm598
        %v600 = vsel %vm599, %v591, %v596
        %v601 = vmul.f32 %v582, %v600
        %v602 = vperm.slane %v236, 1
        %v603 = vmul.f32 %v602, %v601
        %v604 = vperm.slane %v236, 2
        %v605 = vadd.f32 %v603, %v604
        %v606 = vmax.f32 %v605, 0.0
        %607 = vst [vmem:[%s218] sm:$0xff] %v606
        %s608 = sand.u32 %s97, 1
        %s609 = scalar_lea.sflag [#allocation4], %s608
        %s610 = sand.u32 %s97, 1
        %s611 = smul.addr %s610, 8
        %s612 = scalar_lea.vmem [#allocation8], %s611
        // Predicated region
        $region45: #{tpu_custom_call.1} parent=31 // pred_check
          %p613 = pneg %p107
        $region46: #{tpu_custom_call.1} parent=31 // pred_check_branch
          %615 = sbr.rel (%p613) target = $region48
        $region47: #{tpu_custom_call.1} parent=31 // pred_region
          %617 = vsyncadd %s609, 0
          %s618 = smul.addr %s21, 8
          %s619 = scalar_lea.hbm %s3, %s618
          %s621 = sshll.u32 %s612, 4
          %s622 = int_to_ptr.vmem [resolvable:$true] %s621
          %s623 = sshll.u32 %s619, 4
          %s624 = int_to_ptr.hbm [resolvable:$true] %s623
          %626 = dma.vmem_to_hbm [thread:$0]  %s622, 128, %s624, %s609
        $region48: #{tpu_custom_call.1} parent=31 // pred_fallthru
          _
      $region32: #{tpu_custom_call.1} parent=5 // pred_fallthru
        _
      %p627 = scmp.le.s32.totalorder 2, %s16
      // Predicated region
      $region49: #{tpu_custom_call.1} parent=5 // pred_check
        %p628 = pneg %p627
      $region50: #{tpu_custom_call.1} parent=5 // pred_check_branch
        %630 = sbr.rel (%p628) target = $region52
      $region51: #{tpu_custom_call.1} parent=5 // pred_region
        %s631 = ssub.s32 %s16, 2
        // Predicated region
        $region53: #{tpu_custom_call.1} parent=51 // pred_check
          %p632 = pneg %p113
        $region54: #{tpu_custom_call.1} parent=51 // pred_check_branch
          %634 = sbr.rel (%p632) target = $region56
        $region55: #{tpu_custom_call.1} parent=51 // pred_region
          %s635 = sand.u32 %s98, 1
          %s636 = scalar_lea.sflag [#allocation4], %s635
          %s637 = sand.u32 %s98, 1
          %s638 = smul.addr %s637, 8
          %s639 = scalar_lea.vmem [#allocation8], %s638
          %641 = dma.done %s636, 128
        $region56: #{tpu_custom_call.1} parent=51 // pred_fallthru
          _
      $region52: #{tpu_custom_call.1} parent=5 // pred_fallthru
        _
    $region6: #{tpu_custom_call.1} parent=1 // loop_footer
      %s20 = sadd.s32 1, %s16
    $region7: #{tpu_custom_call.1} parent=1 // loop_footer_branch
      %15 = sbr.rel target = $region3
    $region8: #{tpu_custom_call.1} parent=1 // loop_exit
      _
    %642 = vsyncpa [#allocation3], 1
    %s643 = scalar_lea.sflag [#allocation3], 1
    %644 = vsyncpa %s643, 1
    %645 = vsyncpa [#allocation6], 1
    %646 = vsyncpa [#allocation4], 1
    %s647 = scalar_lea.sflag [#allocation4], 1
    %648 = vsyncpa %s647, 1

</llo_original>
